<compile_context>
chip_gen: v7x
topology: tpu7x:2x2x1
jax: 0.10.0
libtpu: 0.0.40
codegen_flags: <defaults>
</compile_context>

<pallas_src>
import functools
import math

import jax
import jax.numpy as jnp
from jax import lax
from jax.experimental import pallas as pl
from jax.experimental.pallas import tpu as pltpu


# ----------------------------- tiling / VMEM helpers -----------------------------
def _round_up(x, m):
    return ((x + m - 1) // m) * m


def _pick_tile(dim, target, align):
    """Largest multiple of `align` that divides `dim` and is <= target; else full dim."""
    if dim <= target:
        return dim
    t = (target // align) * align
    while t >= align:
        if dim % t == 0:
            return t
        t -= align
    return dim


def _vmem_cap_bytes():
    try:
        cap = pltpu.get_tpu_info().vmem_capacity_bytes
    except Exception:
        cap = 64 * 1024 * 1024  # assume v7x-like 64 MiB if the query is unavailable
    return max(int(0.75 * cap), 32 * 1024 * 1024)


def _vmem_limit(block_bytes):
    # declared limit = actual (double-buffered) block bytes + headroom, clamped.
    return int(min(max(block_bytes + (4 << 20), 32 << 20), _vmem_cap_bytes()))


# ----------------------- linear (Conv1D rf=1) kernel -----------------------
def _linear_kernel(x_ref, w_ref, b_ref, o_ref, acc_ref):
    k = pl.program_id(2)

    @pl.when(k == 0)
    def _init():
        acc_ref[...] = jnp.zeros_like(acc_ref)

    acc_ref[...] += jnp.dot(x_ref[...], w_ref[...], preferred_element_type=jnp.float32)

    @pl.when(k == pl.num_programs(2) - 1)
    def _store():
        o_ref[...] = (acc_ref[...] + b_ref[...].astype(jnp.float32)).astype(o_ref.dtype)


def conv1d(x_flat, w, b, *, tm=256, tn=512, tk=512, out_dtype=None):
    """x_flat: (M, K), w: (K, N), b: (N,) -> x_flat @ w + b  (torch.addmm).

    Inputs are used in whatever dtype the caller provides (cast to bf16 in the
    wrapper for MXU throughput); accumulation is f32; bias stays f32.
    M/K/N are padded to tile alignment so tiles stay bounded for awkward shapes.
    """
    M, K = x_flat.shape
    N = w.shape[1]
    out_dtype = out_dtype or x_flat.dtype

    Mp, Kp, Np = _round_up(M, 8), _round_up(K, 128), _round_up(N, 128)
    tm = _pick_tile(Mp, tm, 8)
    tk = _pick_tile(Kp, tk, 128)
    tn = _pick_tile(Np, tn, 128)

    if (Mp, Kp) != (M, K):
        x_flat = jnp.pad(x_flat, ((0, Mp - M), (0, Kp - K)))
    if (Kp, Np) != (K, N):
        w = jnp.pad(w, ((0, Kp - K), (0, Np - N)))
    if Np != N:
        b = jnp.pad(b, (0, Np - N))
    b2 = b.reshape(1, Np)

    xi, wi = x_flat.dtype.itemsize, w.dtype.itemsize
    oi = jnp.dtype(out_dtype).itemsize
    blk_bytes = (2 * tm * tk * xi + 2 * tk * tn * wi + 2 * tn * 4
                 + 2 * tm * tn * oi + tm * tn * 4)

    out = pl.pallas_call(
        _linear_kernel,
        out_shape=jax.ShapeDtypeStruct((Mp, Np), out_dtype),
        grid_spec=pltpu.PrefetchScalarGridSpec(
            num_scalar_prefetch=0,
            grid=(Mp // tm, Np // tn, Kp // tk),
            in_specs=[
                pl.BlockSpec((tm, tk), lambda i, j, k: (i, k)),
                pl.BlockSpec((tk, tn), lambda i, j, k: (k, j)),
                pl.BlockSpec((1, tn), lambda i, j, k: (0, j)),
            ],
            out_specs=pl.BlockSpec((tm, tn), lambda i, j, k: (i, j)),
            scratch_shapes=[pltpu.VMEM((tm, tn), jnp.float32)],
        ),
        compiler_params=pltpu.CompilerParams(
            dimension_semantics=("parallel", "parallel", "arbitrary"),
            vmem_limit_bytes=_vmem_limit(blk_bytes),
        ),
    )(x_flat, w, b2)

    if (Mp, Np) != (M, N):
        out = out[:M, :N]
    return out


# ----------------------------- attention kernel -----------------------------
def _attn_kernel(q_ref, k_ref, v_ref, *rest, scale, tq, tkv, hd, nkv, emit_probs):
    if emit_probs:
        ctx_ref, w_ref, m_ref, l_ref, acc_ref, msnap_ref, escr_ref = rest
    else:
        ctx_ref, m_ref, l_ref, acc_ref = rest
        w_ref = msnap_ref = escr_ref = None

    qi = pl.program_id(2)
    kv = pl.program_id(3)

    @pl.when(kv == 0)
    def _init():
        m_ref[...] = jnp.full_like(m_ref, -jnp.inf)
        l_ref[...] = jnp.zeros_like(l_ref)
        acc_ref[...] = jnp.zeros_like(acc_ref)

    # causal block skip: this kv block is visible iff its first key column index
    # is <= the last query row index of this q tile.
    @pl.when(kv * tkv <= (qi + 1) * tq - 1)
    def _compute():
        # q @ k^T without materializing a transposed copy (contract last dims on MXU).
        s = lax.dot_general(
            q_ref[...], k_ref[...], (((1,), (1,)), ((), ())),
            preferred_element_type=jnp.float32,
        )                                                   # (tq, tkv) f32
        if scale:
            s = s * (1.0 / math.sqrt(hd))
        # in-kernel causal mask (== w*b + -1e9*(1-b), b = tril(ones(n_ctx, n_ctx))).
        row = qi * tq + lax.broadcasted_iota(jnp.int32, s.shape, 0)
        col = kv * tkv + lax.broadcasted_iota(jnp.int32, s.shape, 1)
        s = jnp.where(col <= row, s, -1e9)

        m_prev = m_ref[...]
        m_new = jnp.maximum(m_prev, jnp.max(s, axis=-1, keepdims=True))
        alpha = jnp.exp(m_prev - m_new)
        e = jnp.exp(s - m_new)                              # (tq, tkv) f32
        l_ref[...] = alpha * l_ref[...] + jnp.sum(e, axis=-1, keepdims=True)
        acc_ref[...] = alpha * acc_ref[...] + jnp.dot(
            e.astype(v_ref.dtype), v_ref[...], preferred_element_type=jnp.float32)
        m_ref[...] = m_new

        if emit_probs:
            # keep the unnormalized block + its max snapshot; renormalized once at the end.
            escr_ref[kv] = e
            msnap_ref[kv] = m_new

    @pl.when(kv == nkv - 1)
    def _finalize():
        inv_l = 1.0 / l_ref[...]        # exact: returned probs must sum to 1
        ctx_ref[...] = (acc_ref[...] * inv_l).astype(ctx_ref.dtype)
        if emit_probs:
            m_fin = m_ref[...]
            for j in range(nkv):        # static unroll -> static, lane-aligned slices
                visible = j * tkv <= (qi + 1) * tq - 1
                p_j = escr_ref[j] * (jnp.exp(msnap_ref[j] - m_fin) * inv_l)
                w_ref[:, j * tkv:(j + 1) * tkv] = jnp.where(
                    visible, p_j, 0.0).astype(w_ref.dtype)


def attention_core(qkv, n_head, scale, *, tq=256, tkv=512,
                   return_probs=True, probs_dtype=jnp.float32):
    """qkv: (B, T, 3*nx) from c_attn -> (merged ctx (B, T, nx), probs (B, H, T, T) or None).

    q/k/v split, head split and head merge are done purely by BlockSpec index maps.
    Grid is (B, H, T//tq, T//tkv) with the KV axis innermost (online softmax).
    """
    B, T, threenx = qkv.shape
    nx = threenx // 3
    H = n_head
    hd = nx // n_head
    tq = _pick_tile(T, tq, 8)       # hd should ideally be a multiple of 128 (lane width)
    tkv = _pick_tile(T, tkv, 128)
    nq, nkv = T // tq, T // tkv

    def last_kv(qi):
        # last kv block that a q tile starting at row qi*tq can see (causal).
        return ((qi + 1) * tq - 1) // tkv

    in_specs = [
        # q tile, head h:  qkv[b, qi*tq:(qi+1)*tq, h*hd:(h+1)*hd]
        pl.BlockSpec((None, tq, hd), lambda b, h, qi, kv: (b, qi, h)),
        # k chunk, head h: clamp kv so skipped blocks re-use the previous DMA.
        pl.BlockSpec((None, tkv, hd),
                     lambda b, h, qi, kv: (b, jnp.minimum(kv, last_kv(qi)), H + h)),
        # v chunk, head h
        pl.BlockSpec((None, tkv, hd),
                     lambda b, h, qi, kv: (b, jnp.minimum(kv, last_kv(qi)), 2 * H + h)),
    ]
    ctx_spec = pl.BlockSpec((None, tq, hd), lambda b, h, qi, kv: (b, qi, h))
    ctx_shape = jax.ShapeDtypeStruct((B, T, nx), qkv.dtype)

    scratch = [
        pltpu.VMEM((tq, 1), jnp.float32),   # running max m
        pltpu.VMEM((tq, 1), jnp.float32),   # running denom l
        pltpu.VMEM((tq, hd), jnp.float32),  # ctx accumulator
    ]

    itm = qkv.dtype.itemsize
    blk_bytes = (2 * tq * hd * itm            # q (double-buffered)
                 + 2 * 2 * tkv * hd * itm     # k, v
                 + 2 * tq * hd * itm          # ctx out
                 + 4 * tq * tkv * 4           # in-kernel temporaries
                 + tq * (hd + 2) * 4)         # scratch

    if return_probs:
        out_shape = (ctx_shape, jax.ShapeDtypeStruct((B, H, T, T), probs_dtype))
        out_specs = [ctx_spec,
                     pl.BlockSpec((None, None, tq, T),
                                  lambda b, h, qi, kv: (b, h, qi, 0))]
        scratch = scratch + [
            pltpu.VMEM((nkv, tq, 1), jnp.float32),    # per-block max snapshots
            pltpu.VMEM((nkv, tq, tkv), jnp.float32),  # per-block exp tiles
        ]
        blk_bytes += 2 * tq * T * jnp.dtype(probs_dtype).itemsize
        blk_bytes += nkv * tq * (tkv + 1) * 4
    else:
        out_shape = ctx_shape
        out_specs = ctx_spec

    kernel = functools.partial(_attn_kernel, scale=scale, tq=tq, tkv=tkv, hd=hd,
                               nkv=nkv, emit_probs=return_probs)

    out = pl.pallas_call(
        kernel,
        out_shape=out_shape,
        grid_spec=pltpu.PrefetchScalarGridSpec(
            num_scalar_prefetch=0,
            grid=(B, H, nq, nkv),
            in_specs=in_specs,
            out_specs=out_specs,
            scratch_shapes=scratch,
        ),
        compiler_params=pltpu.CompilerParams(
            dimension_semantics=("parallel", "parallel", "parallel", "arbitrary"),
            vmem_limit_bytes=_vmem_limit(blk_bytes),
        ),
    )(qkv, qkv, qkv)

    if return_probs:
        return out  # (ctx, probs)
    return out, None


# ----------------------------- full module forward -----------------------------
def attention_forward(x, params, n_head, scale, *, compute_dtype=jnp.bfloat16,
                      tm=256, tn=512, tk=512, tq=256, tkv=512,
                      return_probs=True, probs_dtype=jnp.float32):
    """Equivalent of Attention.forward: returns (a, w). Dropouts (p=0.0) are identity."""
    B, T, nx = x.shape
    cdt = jnp.dtype(compute_dtype) if compute_dtype is not None else x.dtype
    xc = x.astype(cdt)
    w_attn = params["c_attn_w"].astype(cdt)
    w_proj = params["c_proj_w"].astype(cdt)

    # c_attn: (B*T, nx) @ (nx, 3nx) + b   -> bf16 intermediate (halves HBM traffic)
    qkv = conv1d(xc.reshape(B * T, nx), w_attn, params["c_attn_b"],
                 tm=tm, tn=tn, tk=tk)
    qkv = qkv.reshape(B, T, 3 * nx)

    ctx, w = attention_core(qkv, n_head, scale, tq=tq, tkv=tkv,
                            return_probs=return_probs, probs_dtype=probs_dtype)

    # c_proj: final output back in the input dtype (f32).
    a = conv1d(ctx.reshape(B * T, nx), w_proj, params["c_proj_b"],
               tm=tm, tn=tn, tk=tk, out_dtype=x.dtype)
    return a.reshape(B, T, nx), w


# ----------------------------- pure-JAX reference -----------------------------
def _split_heads(x, n_head):
    B, T, nx = x.shape
    x = x.reshape(B, T, n_head, nx // n_head)
    return jnp.transpose(x, (0, 2, 1, 3))  # (B, H, T, hd)


def _merge_heads(x):
    B, H, T, hd = x.shape
    return jnp.transpose(x, (0, 2, 1, 3)).reshape(B, T, H * hd)


def reference_forward(x, params, n_head, scale):
    B, T, nx = x.shape
    qkv = x.reshape(B * T, nx) @ params["c_attn_w"] + params["c_attn_b"]
    qkv = qkv.reshape(B, T, 3 * nx)
    query, key, value = jnp.split(qkv, 3, axis=2)
    q = _split_heads(query, n_head)
    k = _split_heads(key, n_head)
    v = _split_heads(value, n_head)
    s = jnp.einsum("bhqd,bhkd->bhqk", q, k)
    if scale:
        s = s / math.sqrt(v.shape[-1])
    mask = jnp.tril(jnp.ones((T, T), dtype=jnp.float32))
    s = s * mask + (-1e9) * (1.0 - mask)
    w = jax.nn.softmax(s, axis=-1)
    ctx = jnp.einsum("bhqk,bhkd->bhqd", w, v)
    a = _merge_heads(ctx)
    a = a.reshape(B * T, nx) @ params["c_proj_w"] + params["c_proj_b"]
    return a.reshape(B, T, nx), w


# ----------------------------- main -----------------------------
if __name__ == "__main__":
    # hd = nx // n_head = 128 keeps per-head q/k/v/ctx blocks 128-lane dense.
    # tq=64 / tkv=128 -> 4 query tiles x 2 kv tiles per head: exercises the online
    # softmax kv loop and the causal block-skip path (qi=0,1 never touch kv block 1).
    B, T, nx, n_head = 2, 256, 256, 2
    scale = True

    key = jax.random.PRNGKey(0)
    k_x, k_w1, k_b1, k_w2, k_b2 = jax.random.split(key, 5)
    x = jax.random.normal(k_x, (B, T, nx), dtype=jnp.float32)
    params = {
        "c_attn_w": 0.02 * jax.random.normal(k_w1, (nx, 3 * nx), dtype=jnp.float32),
        "c_attn_b": 0.1 * jax.random.normal(k_b1, (3 * nx,), dtype=jnp.float32),
        "c_proj_w": 0.02 * jax.random.normal(k_w2, (nx, nx), dtype=jnp.float32),
        "c_proj_b": 0.1 * jax.random.normal(k_b2, (nx,), dtype=jnp.float32),
    }

    a, w = attention_forward(x, params, n_head, scale, tq=64, tkv=128)
    a = jax.block_until_ready(a)
    w = jax.block_until_ready(w)

    a_exp, w_exp = reference_forward(x, params, n_head, scale)
    assert a.shape == (B, T, nx) and w.shape == (B, n_head, T, T)
    err_a = float(jnp.max(jnp.abs(a - a_exp)))
    err_w = float(jnp.max(jnp.abs(w - w_exp)))
    # tolerances accommodate bf16 MXU compute (accumulation is f32 throughout)
    assert jnp.allclose(a, a_exp, atol=2e-2, rtol=2e-2), err_a
    assert jnp.allclose(w, w_exp, atol=5e-3, rtol=5e-3), err_w

    # pure flash path (no O(T^2) probability write) — module semantics only need it
    # when w is consumed downstream.
    a2, w2 = attention_forward(x, params, n_head, scale, tq=64, tkv=128,
                               return_probs=False)
    a2 = jax.block_until_ready(a2)
    assert w2 is None
    assert jnp.allclose(a2, a_exp, atol=2e-2, rtol=2e-2)

    print("KERNEL_OK")
</pallas_src>

<mosaic_0001>
module attributes {stable_mosaic.version = 11 : i64} {
  func.func @_linear_kernel(%arg0: i32, %arg1: i32, %arg2: i32, %arg3: memref<256x256xbf16, #tpu.memory_space<vmem>>, %arg4: memref<256x384xbf16, #tpu.memory_space<vmem>>, %arg5: memref<1x384xf32, #tpu.memory_space<vmem>>, %arg6: memref<256x384xbf16, #tpu.memory_space<vmem>>, %arg7: memref<256x384xf32, #tpu.memory_space<vmem>>) attributes {dimension_semantics = [#tpu.dimension_semantics<parallel>, #tpu.dimension_semantics<parallel>, #tpu.dimension_semantics<arbitrary>], iteration_bounds = array<i64: 2, 2, 1>, scalar_prefetch = 0 : i64, scratch_operands = 1 : i64, tpu.core_type = #tpu.core_type<tc>, window_params = [{transform_indices = @transform_0, window_bounds = array<i64: 256, 256>}, {transform_indices = @transform_1, window_bounds = array<i64: 256, 384>}, {transform_indices = @transform_2, window_bounds = array<i64: 1, 384>}, {transform_indices = @transform_3, window_bounds = array<i64: 256, 384>}]} {
    %c0_i32 = arith.constant 0 : i32
    %0 = arith.cmpi eq, %arg2, %c0_i32 : i32
    %1 = arith.extui %0 : i1 to i32
    %c0_i32_0 = arith.constant 0 : i32
    %2 = arith.cmpi ne, %1, %c0_i32_0 : i32
    scf.if %2 {
      %cst_10 = arith.constant 0.000000e+00 : f32
      %12 = vector.broadcast %cst_10 : f32 to vector<256x384xf32>
      %c0_11 = arith.constant 0 : index
      %c0_12 = arith.constant 0 : index
      %13 = vector.load %arg7[%c0_11, %c0_12] : memref<256x384xf32, #tpu.memory_space<vmem>>, vector<256x384xf32>
      tpu.vector_store %arg7[%c0_11, %c0_12], %12 {strides = array<i32>} : memref<256x384xf32, #tpu.memory_space<vmem>>, vector<256x384xf32>,
    } else {
    }
    %c0 = arith.constant 0 : index
    %c0_1 = arith.constant 0 : index
    %3 = vector.load %arg7[%c0, %c0_1] : memref<256x384xf32, #tpu.memory_space<vmem>>, vector<256x384xf32>
    %c0_2 = arith.constant 0 : index
    %c0_3 = arith.constant 0 : index
    %4 = vector.load %arg3[%c0_2, %c0_3] : memref<256x256xbf16, #tpu.memory_space<vmem>>, vector<256x256xbf16>
    %c0_4 = arith.constant 0 : index
    %c0_5 = arith.constant 0 : index
    %5 = vector.load %arg4[%c0_4, %c0_5] : memref<256x384xbf16, #tpu.memory_space<vmem>>, vector<256x384xbf16>
    %cst = arith.constant dense<0.000000e+00> : vector<256x384xf32>
    %6 = tpu.matmul %4, %5, %cst {dimension_numbers = #tpu.dot_dimension_numbers<[1], [0], [0], [1], [0, 0, 1, 1], [], []>} : vector<256x256xbf16>, vector<256x384xbf16>, vector<256x384xf32> -> vector<256x384xf32>
    %7 = arith.addf %3, %6 : vector<256x384xf32>
    %c0_6 = arith.constant 0 : index
    %c0_7 = arith.constant 0 : index
    %8 = vector.load %arg7[%c0_6, %c0_7] : memref<256x384xf32, #tpu.memory_space<vmem>>, vector<256x384xf32>
    tpu.vector_store %arg7[%c0_6, %c0_7], %7 {strides = array<i32>} : memref<256x384xf32, #tpu.memory_space<vmem>>, vector<256x384xf32>,
    %c0_i32_8 = arith.constant 0 : i32
    %9 = arith.cmpi eq, %arg2, %c0_i32_8 : i32
    %10 = arith.extui %9 : i1 to i32
    %c0_i32_9 = arith.constant 0 : i32
    %11 = arith.cmpi ne, %10, %c0_i32_9 : i32
    scf.if %11 {
      %c0_10 = arith.constant 0 : index
      %c0_11 = arith.constant 0 : index
      %12 = vector.load %arg7[%c0_10, %c0_11] : memref<256x384xf32, #tpu.memory_space<vmem>>, vector<256x384xf32>
      %c0_12 = arith.constant 0 : index
      %c0_13 = arith.constant 0 : index
      %13 = vector.load %arg5[%c0_12, %c0_13] : memref<1x384xf32, #tpu.memory_space<vmem>>, vector<1x384xf32>
      %14 = vector.broadcast %13 : vector<1x384xf32> to vector<256x384xf32>
      %15 = arith.addf %12, %14 : vector<256x384xf32>
      %16 = arith.truncf %15 : vector<256x384xf32> to vector<256x384xbf16>
      %c0_14 = arith.constant 0 : index
      %c0_15 = arith.constant 0 : index
      %17 = vector.load %arg6[%c0_14, %c0_15] : memref<256x384xbf16, #tpu.memory_space<vmem>>, vector<256x384xbf16>
      tpu.vector_store %arg6[%c0_14, %c0_15], %16 {strides = array<i32>} : memref<256x384xbf16, #tpu.memory_space<vmem>>, vector<256x384xbf16>,
    } else {
    }
    return
  }
  func.func @transform_0(%arg0: i32, %arg1: i32, %arg2: i32) -> (i32, i32) {
    %c0_i32 = arith.constant 0 : i32
    return %arg0, %arg2 : i32, i32
  }
  func.func @transform_1(%arg0: i32, %arg1: i32, %arg2: i32) -> (i32, i32) {
    %c0_i32 = arith.constant 0 : i32
    return %arg2, %arg1 : i32, i32
  }
  func.func @transform_2(%arg0: i32, %arg1: i32, %arg2: i32) -> (i32, i32) {
    %c0_i32 = arith.constant 0 : i32
    %c0_i32_0 = arith.constant 0 : i32
    return %c0_i32, %arg1 : i32, i32
  }
  func.func @transform_3(%arg0: i32, %arg1: i32, %arg2: i32) -> (i32, i32) {
    %c0_i32 = arith.constant 0 : i32
    return %arg0, %arg1 : i32, i32
  }
}

</mosaic_0001>

<llo_original>
// kernel: tpu_custom_call.1
$region0: #{tpu_custom_call.1}
  #allocation0 [shape = 'u32[]', space=smem, size = 0x4, offset = 0x4, fixed_abs, tag = 'smem constant byte address 0x4 - core index']
  #allocation1 [shape = 'u32[144,128]{1,0:T(1,128)}', space=vmem, size = 0x12000, scoped, tag = 'internal scratch']
  #allocation2 [shape = 'f32[256,384]{1,0:T(8,128)}', space=vmem, size = 0x60000, scoped, tag = 'scratch operand']
  %s0 = inlined_call_operand.hbm [shape: bf16[512,256], index: 0, kind: input, shape index: {}]
  %s1 = inlined_call_operand.hbm [shape: bf16[256,768], index: 1, kind: input, shape index: {}]
  %s2 = inlined_call_operand.vmem [shape: f32[1,768], index: 2, kind: input, shape index: {}]
  %s3 = inlined_call_operand.hbm [shape: bf16[512,768], index: 3, kind: output, shape index: {}]
  %s4 = sld [smem:[#allocation0]]
  $region61: #{tpu_custom_call.1} parent=0
    _
  %s6 = ssub.s32 1, %s4
  %s7 = scalar_select 0, %s6, %s4
  $region1: #{tpu_custom_call.1} parent=0
    #allocation3 [shape = 'u8[262144]{0}', space=vmem, size = 0x40000, scoped, tag = 'input window, operand 0']
    #allocation4 [shape = 's32[2]{0}', space=sflag, size = 0x8, scoped, tag = 'scoped memory for tpu_custom_call.1']
    #allocation5 [shape = 's32[2]{0}', space=sflag, size = 0x8, scoped, tag = 'scoped memory for tpu_custom_call.1']
    #allocation6 [shape = 'u8[393216]{0}', space=vmem, size = 0x60000, scoped, tag = 'input window, operand 1']
    #allocation7 [shape = 's32[2]{0}', space=sflag, size = 0x8, scoped, tag = 'scoped memory for tpu_custom_call.1']
    #allocation8 [shape = 'u8[393216]{0}', space=vmem, size = 0x60000, scoped, tag = 'output window, operand 0']
    %8 = vsyncpa [#allocation4], 0
    %s9 = scalar_lea.sflag [#allocation4], 1
    %10 = vsyncpa %s9, 0
    %11 = vsyncpa [#allocation7], 0
    %s12 = scalar_lea.sflag [#allocation7], 1
    %13 = vsyncpa %s12, 0
    %14 = vsyncpa [#allocation5], 0
    %s15 = scalar_lea.sflag [#allocation5], 1
    %16 = vsyncpa %s15, 0
    loop: start=0, step=1, limit=6
    $region2: #{tpu_custom_call.1} parent=1 // loop_pre_header
      _
    $region3: #{tpu_custom_call.1} parent=1 // loop_header
      %s18 = sphi 0, %s22
      %p19 = scmp.ge.s32.totalorder %s18, 6
      %s25 = sphi 0, %s44
      %s26 = sphi 0, %s40
      %s27 = sphi 0, %s36
      %s28 = sphi 0, %s25
      %s29 = sphi 0, %s26
      %s30 = sphi 0, %s27
      %s31 = sphi 0, %s28
      %s32 = sphi 0, %s29
      %s33 = sphi 0, %s30
      %s49 = sphi 0, %s51
      %s52 = sphi 0, %s49
      %s53 = sphi 0, %s52
      %s69 = sphi 0, %s53
      %s77 = sphi 0, %s79
      %s80 = sphi 0, %s77
      %s81 = sphi 0, %s80
      %s97 = sphi 0, %s81
      %s103 = sphi 0, %s105
      %s106 = sphi 0, %s103
      %s107 = sphi 0, %s106
      %s123 = sphi 0, %s107
      %s131 = sphi 0, %s133
      %s134 = sphi 0, %s131
      %s135 = sphi 0, %s134
      %s151 = sphi 0, %s135
    $region4: #{tpu_custom_call.1} parent=1 // loop_header_branch
      %21 = sbr.rel (%p19) target = $region8
    $region5: #{tpu_custom_call.1} parent=1 // loop_body
      %s23 = ssub.s32 %s18, 1
      %s24 = ssub.s32 %s18, 2
      %s34 = sadd.s32 1, %s27
      %p35 = scmp.ge.s32.totalorder %s34, 1
      %s36 = scalar_select %p35, 0, %s34
      %s37 = sadd.s32 1, %s26
      %s38 = scalar_select %p35, %s37, %s26
      %p39 = scmp.ge.s32.totalorder %s38, 2
      %s40 = scalar_select %p39, 0, %s38
      %s41 = sadd.s32 1, %s25
      %s42 = scalar_select %p39, %s41, %s25
      %p43 = scmp.ge.s32.totalorder %s42, 2
      %s44 = scalar_select %p43, 0, %s42
      %s45 = ssub.s32 %s25, %s44
      %s46 = ssub.s32 %s27, %s36
      %s47 = sor.u32 %s45, %s46
      %p48 = scmp.eq.s32.totalorder %s47, 0
      %s50 = sadd.s32 %s49, 1
      %s51 = scalar_select %p48, %s49, %s50
      %p54 = pneg %p48
      %p55 = scmp.eq.s32.totalorder %s18, 3
      %p56 = por %p54, %p55
      %p57 = scmp.ne.s32.totalorder %s49, %s52
      %p58 = scmp.eq.s32.totalorder %s18, 0
      %p59 = por %p57, %p58
      %p60 = scmp.ne.s32.totalorder %s49, %s52
      %p61 = scmp.eq.s32.totalorder %s23, 3
      %p62 = por %p60, %p61
      %p63 = scmp.ne.s32.totalorder %s52, %s53
      %p64 = scmp.eq.s32.totalorder %s23, 0
      %p65 = por %p63, %p64
      %p66 = scmp.ne.s32.totalorder %s52, %s53
      %p67 = scmp.eq.s32.totalorder %s24, 3
      %p68 = por %p66, %p67
      %p70 = scmp.ne.s32.totalorder %s53, %s69
      %p71 = scmp.eq.s32.totalorder %s24, 0
      %p72 = por %p70, %p71
      %s73 = ssub.s32 %s27, %s36
      %s74 = ssub.s32 %s26, %s40
      %s75 = sor.u32 %s73, %s74
      %p76 = scmp.eq.s32.totalorder %s75, 0
      %s78 = sadd.s32 %s77, 1
      %s79 = scalar_select %p76, %s77, %s78
      %p82 = pneg %p76
      %p83 = scmp.eq.s32.totalorder %s18, 3
      %p84 = por %p82, %p83
      %p85 = scmp.ne.s32.totalorder %s77, %s80
      %p86 = scmp.eq.s32.totalorder %s18, 0
      %p87 = por %p85, %p86
      %p88 = scmp.ne.s32.totalorder %s77, %s80
      %p89 = scmp.eq.s32.totalorder %s23, 3
      %p90 = por %p88, %p89
      %p91 = scmp.ne.s32.totalorder %s80, %s81
      %p92 = scmp.eq.s32.totalorder %s23, 0
      %p93 = por %p91, %p92
      %p94 = scmp.ne.s32.totalorder %s80, %s81
      %p95 = scmp.eq.s32.totalorder %s24, 3
      %p96 = por %p94, %p95
      %p98 = scmp.ne.s32.totalorder %s81, %s97
      %p99 = scmp.eq.s32.totalorder %s24, 0
      %p100 = por %p98, %p99
      %s101 = ssub.s32 %s26, %s40
      %p102 = scmp.eq.s32.totalorder %s101, 0
      %s104 = sadd.s32 %s103, 1
      %s105 = scalar_select %p102, %s103, %s104
      %p108 = pneg %p102
      %p109 = scmp.eq.s32.totalorder %s18, 3
      %p110 = por %p108, %p109
      %p111 = scmp.ne.s32.totalorder %s103, %s106
      %p112 = scmp.eq.s32.totalorder %s18, 0
      %p113 = por %p111, %p112
      %p114 = scmp.ne.s32.totalorder %s103, %s106
      %p115 = scmp.eq.s32.totalorder %s23, 3
      %p116 = por %p114, %p115
      %p117 = scmp.ne.s32.totalorder %s106, %s107
      %p118 = scmp.eq.s32.totalorder %s23, 0
      %p119 = por %p117, %p118
      %p120 = scmp.ne.s32.totalorder %s106, %s107
      %p121 = scmp.eq.s32.totalorder %s24, 3
      %p122 = por %p120, %p121
      %p124 = scmp.ne.s32.totalorder %s107, %s123
      %p125 = scmp.eq.s32.totalorder %s24, 0
      %p126 = por %p124, %p125
      %s127 = ssub.s32 %s25, %s44
      %s128 = ssub.s32 %s26, %s40
      %s129 = sor.u32 %s127, %s128
      %p130 = scmp.eq.s32.totalorder %s129, 0
      %s132 = sadd.s32 %s131, 1
      %s133 = scalar_select %p130, %s131, %s132
      %p136 = pneg %p130
      %p137 = scmp.eq.s32.totalorder %s18, 3
      %p138 = por %p136, %p137
      %p139 = scmp.ne.s32.totalorder %s131, %s134
      %p140 = scmp.eq.s32.totalorder %s18, 0
      %p141 = por %p139, %p140
      %p142 = scmp.ne.s32.totalorder %s131, %s134
      %p143 = scmp.eq.s32.totalorder %s23, 3
      %p144 = por %p142, %p143
      %p145 = scmp.ne.s32.totalorder %s134, %s135
      %p146 = scmp.eq.s32.totalorder %s23, 0
      %p147 = por %p145, %p146
      %p148 = scmp.ne.s32.totalorder %s134, %s135
      %p149 = scmp.eq.s32.totalorder %s24, 3
      %p150 = por %p148, %p149
      %p152 = scmp.ne.s32.totalorder %s135, %s151
      %p153 = scmp.eq.s32.totalorder %s24, 0
      %p154 = por %p152, %p153
      %p155 = scmp.le.s32.totalorder 1, %s18
      %p156 = scmp.lt.s32.totalorder %s18, 5
      %p157 = pnand %p155, %p156
      %p158 = pneg %p157
      // Predicated region
      $region9: #{tpu_custom_call.1} parent=5 // pred_check
        _
      $region10: #{tpu_custom_call.1} parent=5 // pred_check_branch
        %160 = sbr.rel (%p157) target = $region12
      $region11: #{tpu_custom_call.1} parent=5 // pred_region
        %s161 = ssub.s32 %s18, 1
      $region12: #{tpu_custom_call.1} parent=5 // pred_fallthru
        _
      %p162 = scmp.lt.s32.totalorder %s18, 4
      // Predicated region
      $region13: #{tpu_custom_call.1} parent=5 // pred_check
        %p163 = pneg %p162
      $region14: #{tpu_custom_call.1} parent=5 // pred_check_branch
        %165 = sbr.rel (%p163) target = $region16
      $region15: #{tpu_custom_call.1} parent=5 // pred_region
        // Predicated region
        $region17: #{tpu_custom_call.1} parent=15 // pred_check
          %p166 = pneg %p59
        $region18: #{tpu_custom_call.1} parent=15 // pred_check_branch
          %168 = sbr.rel (%p166) target = $region20
        $region19: #{tpu_custom_call.1} parent=15 // pred_region
          %s169 = sand.u32 %s49, 1
          %s170 = scalar_lea.sflag [#allocation4], %s169
          %s171 = sand.u32 %s49, 1
          %s172 = smul.addr %s171, 256
          %s173 = scalar_lea.vmem [#allocation3], %s172
          %s174 = smul.u32 32, %s25
          %s175 = smul.u32 2, %s27
          %s177 = ssub.s32 4096, 4096
          %178 = vsyncadd %s170, %s177
          %s179 = smul.addr %s174, 2
          %s180 = sadd.s32 %s175, %s179
          %s181 = smul.addr %s180, 64
          %s182 = scalar_lea.hbm %s0, %s181
          %s183 = sshll.u32 %s173, 4
          %s184 = int_to_ptr.vmem [resolvable:$true] %s183
          %189 = dma.hbm_to_vmem [thread:$0]  %s182, 4096, %s184, %s170, 128, 128, 8
        $region20: #{tpu_custom_call.1} parent=15 // pred_fallthru
          _
        // Predicated region
        $region21: #{tpu_custom_call.1} parent=15 // pred_check
          %p190 = pneg %p87
        $region22: #{tpu_custom_call.1} parent=15 // pred_check_branch
          %192 = sbr.rel (%p190) target = $region24
        $region23: #{tpu_custom_call.1} parent=15 // pred_region
          %s193 = sand.u32 %s77, 1
          %s194 = scalar_lea.sflag [#allocation7], %s193
          %s195 = sand.u32 %s77, 1
          %s196 = smul.addr %s195, 384
          %s197 = scalar_lea.vmem [#allocation6], %s196
          %s198 = smul.u32 32, %s27
          %s199 = smul.u32 3, %s26
          %s201 = ssub.s32 6144, 6144
          %202 = vsyncadd %s194, %s201
          %s203 = smul.addr %s198, 6
          %s204 = sadd.s32 %s199, %s203
          %s205 = smul.addr %s204, 64
          %s206 = scalar_lea.hbm %s1, %s205
          %s207 = sshll.u32 %s197, 4
          %s208 = int_to_ptr.vmem [resolvable:$true] %s207
          %213 = dma.hbm_to_vmem [thread:$0]  %s206, 6144, %s208, %s194, 384, 192, 12
        $region24: #{tpu_custom_call.1} parent=15 // pred_fallthru
          _
        // Predicated region
        $region25: #{tpu_custom_call.1} parent=15 // pred_check
          %p214 = pneg %p113
        $region26: #{tpu_custom_call.1} parent=15 // pred_check_branch
          %216 = sbr.rel (%p214) target = $region28
        $region27: #{tpu_custom_call.1} parent=15 // pred_region
          %s217 = smul.u32 3, %s26
          %p218 = scmp.lt.s32.totalorder %s217, 5
          %s219 = scalar_select %p218, %s217, 5
          %s220 = scalar_lea.vmem %s2, %s219
          %s221 = smul.u32 3, %s26
        $region28: #{tpu_custom_call.1} parent=15 // pred_fallthru
          _
      $region16: #{tpu_custom_call.1} parent=5 // pred_fallthru
        _
      %p222 = scmp.le.s32.totalorder 1, %s18
      %p223 = scmp.lt.s32.totalorder %s18, 5
      %p224 = pnand %p222, %p223
      %p225 = pneg %p224
      // Predicated region
      $region29: #{tpu_custom_call.1} parent=5 // pred_check
        _
      $region30: #{tpu_custom_call.1} parent=5 // pred_check_branch
        %227 = sbr.rel (%p224) target = $region32
      $region31: #{tpu_custom_call.1} parent=5 // pred_region
        %s228 = ssub.s32 %s18, 1
        %s229 = sand.u32 %s52, 1
        %s230 = scalar_lea.sflag [#allocation4], %s229
        %s231 = sand.u32 %s52, 1
        %s232 = smul.addr %s231, 256
        %s233 = scalar_lea.vmem [#allocation3], %s232
        // Predicated region
        $region33: #{tpu_custom_call.1} parent=31 // pred_check
          %p234 = pneg %p65
        $region34: #{tpu_custom_call.1} parent=31 // pred_check_branch
          %236 = sbr.rel (%p234) target = $region36
        $region35: #{tpu_custom_call.1} parent=31 // pred_region
          %237 = dma.done %s230, 4096
        $region36: #{tpu_custom_call.1} parent=31 // pred_fallthru
          _
        %s238 = sand.u32 %s80, 1
        %s239 = scalar_lea.sflag [#allocation7], %s238
        %s240 = sand.u32 %s80, 1
        %s241 = smul.addr %s240, 384
        %s242 = scalar_lea.vmem [#allocation6], %s241
        // Predicated region
        $region37: #{tpu_custom_call.1} parent=31 // pred_check
          %p243 = pneg %p93
        $region38: #{tpu_custom_call.1} parent=31 // pred_check_branch
          %245 = sbr.rel (%p243) target = $region40
        $region39: #{tpu_custom_call.1} parent=31 // pred_region
          %246 = dma.done %s239, 6144
        $region40: #{tpu_custom_call.1} parent=31 // pred_fallthru
          _
        %s247 = sand.u32 %s52, 1
        %s248 = scalar_lea.sflag [#allocation4], %s247
        %s249 = sand.u32 %s52, 1
        %s250 = smul.addr %s249, 256
        %s251 = scalar_lea.vmem [#allocation3], %s250
        %p252 = pneg %p65
        %p253 = pneg %p62
        %s254 = sand.u32 %s80, 1
        %s255 = scalar_lea.sflag [#allocation7], %s254
        %s256 = sand.u32 %s80, 1
        %s257 = smul.addr %s256, 384
        %s258 = scalar_lea.vmem [#allocation6], %s257
        %p259 = pneg %p93
        %p260 = pneg %p90
        %s261 = smul.u32 3, %s29
        %p262 = scmp.lt.s32.totalorder %s261, 5
        %s263 = scalar_select %p262, %s261, 5
        %s264 = scalar_lea.vmem %s2, %s263
        %p265 = pneg %p119
        %p266 = pneg %p116
        %p267 = pneg %p147
        %p268 = pneg %p144
        %s269 = sand.u32 %s134, 1
        %s270 = scalar_lea.sflag [#allocation5], %s269
        %s271 = sand.u32 %s134, 1
        %s272 = smul.addr %s271, 384
        %s273 = scalar_lea.vmem [#allocation8], %s272
        %s274 = smul.u32 32, %s28
        %s275 = smul.u32 2, %s30
        %s276 = smul.u32 32, %s30
        %s277 = smul.u32 3, %s29
        %s278 = smul.u32 3, %s29
        %p279 = scmp.lt.s32.totalorder %s278, 5
        %s280 = scalar_select %p279, %s278, 5
        %s281 = scalar_lea.vmem %s2, %s280
        %s282 = smul.u32 3, %s29
        %s283 = smul.u32 32, %s28
        %s284 = smul.u32 3, %s29
        %p286 = scmp.eq.s32.totalorder %s30, 0
        // Predicated region
        $region41: #{tpu_custom_call.1} parent=31 // pred_check
          %p287 = pneg %p286
        $region42: #{tpu_custom_call.1} parent=31 // pred_check_branch
          %289 = sbr.rel (%p287) target = $region44
        $region43: #{tpu_custom_call.1} parent=31 // pred_region
          %290 = vst [vmem:[#allocation2] sm:$0xff] 0.0
          %291 = vst [vmem:[#allocation2 + $0x8] sm:$0xff] 0.0
          %292 = vst [vmem:[#allocation2 + $0x10] sm:$0xff] 0.0
          %293 = vst [vmem:[#allocation2 + $0x18] sm:$0xff] 0.0
          %294 = vst [vmem:[#allocation2 + $0x20] sm:$0xff] 0.0
          %295 = vst [vmem:[#allocation2 + $0x28] sm:$0xff] 0.0
          %296 = vst [vmem:[#allocation2 + $0x30] sm:$0xff] 0.0
          %297 = vst [vmem:[#allocation2 + $0x38] sm:$0xff] 0.0
          %298 = vst [vmem:[#allocation2 + $0x40] sm:$0xff] 0.0
          %299 = vst [vmem:[#allocation2 + $0x48] sm:$0xff] 0.0
          %300 = vst [vmem:[#allocation2 + $0x50] sm:$0xff] 0.0
          %301 = vst [vmem:[#allocation2 + $0x58] sm:$0xff] 0.0
          %302 = vst [vmem:[#allocation2 + $0x60] sm:$0xff] 0.0
          %303 = vst [vmem:[#allocation2 + $0x68] sm:$0xff] 0.0
          %304 = vst [vmem:[#allocation2 + $0x70] sm:$0xff] 0.0
          %305 = vst [vmem:[#allocation2 + $0x78] sm:$0xff] 0.0
          %306 = vst [vmem:[#allocation2 + $0x80] sm:$0xff] 0.0
          %307 = vst [vmem:[#allocation2 + $0x88] sm:$0xff] 0.0
          %308 = vst [vmem:[#allocation2 + $0x90] sm:$0xff] 0.0
          %309 = vst [vmem:[#allocation2 + $0x98] sm:$0xff] 0.0
          %310 = vst [vmem:[#allocation2 + $0xa0] sm:$0xff] 0.0
          %311 = vst [vmem:[#allocation2 + $0xa8] sm:$0xff] 0.0
          %312 = vst [vmem:[#allocation2 + $0xb0] sm:$0xff] 0.0
          %313 = vst [vmem:[#allocation2 + $0xb8] sm:$0xff] 0.0
          %314 = vst [vmem:[#allocation2 + $0xc0] sm:$0xff] 0.0
          %315 = vst [vmem:[#allocation2 + $0xc8] sm:$0xff] 0.0
          %316 = vst [vmem:[#allocation2 + $0xd0] sm:$0xff] 0.0
          %317 = vst [vmem:[#allocation2 + $0xd8] sm:$0xff] 0.0
          %318 = vst [vmem:[#allocation2 + $0xe0] sm:$0xff] 0.0
          %319 = vst [vmem:[#allocation2 + $0xe8] sm:$0xff] 0.0
          %320 = vst [vmem:[#allocation2 + $0xf0] sm:$0xff] 0.0
          %321 = vst [vmem:[#allocation2 + $0xf8] sm:$0xff] 0.0
          %322 = vst [vmem:[#allocation2 + $0x100] sm:$0xff] 0.0
          %323 = vst [vmem:[#allocation2 + $0x108] sm:$0xff] 0.0
          %324 = vst [vmem:[#allocation2 + $0x110] sm:$0xff] 0.0
          %325 = vst [vmem:[#allocation2 + $0x118] sm:$0xff] 0.0
          %326 = vst [vmem:[#allocation2 + $0x120] sm:$0xff] 0.0
          %327 = vst [vmem:[#allocation2 + $0x128] sm:$0xff] 0.0
          %328 = vst [vmem:[#allocation2 + $0x130] sm:$0xff] 0.0
          %329 = vst [vmem:[#allocation2 + $0x138] sm:$0xff] 0.0
          %330 = vst [vmem:[#allocation2 + $0x140] sm:$0xff] 0.0
          %331 = vst [vmem:[#allocation2 + $0x148] sm:$0xff] 0.0
          %332 = vst [vmem:[#allocation2 + $0x150] sm:$0xff] 0.0
          %333 = vst [vmem:[#allocation2 + $0x158] sm:$0xff] 0.0
          %334 = vst [vmem:[#allocation2 + $0x160] sm:$0xff] 0.0
          %335 = vst [vmem:[#allocation2 + $0x168] sm:$0xff] 0.0
          %336 = vst [vmem:[#allocation2 + $0x170] sm:$0xff] 0.0
          %337 = vst [vmem:[#allocation2 + $0x178] sm:$0xff] 0.0
          %338 = vst [vmem:[#allocation2 + $0x180] sm:$0xff] 0.0
          %339 = vst [vmem:[#allocation2 + $0x188] sm:$0xff] 0.0
          %340 = vst [vmem:[#allocation2 + $0x190] sm:$0xff] 0.0
          %341 = vst [vmem:[#allocation2 + $0x198] sm:$0xff] 0.0
          %342 = vst [vmem:[#allocation2 + $0x1a0] sm:$0xff] 0.0
          %343 = vst [vmem:[#allocation2 + $0x1a8] sm:$0xff] 0.0
          %344 = vst [vmem:[#allocation2 + $0x1b0] sm:$0xff] 0.0
          %345 = vst [vmem:[#allocation2 + $0x1b8] sm:$0xff] 0.0
          %346 = vst [vmem:[#allocation2 + $0x1c0] sm:$0xff] 0.0
          %347 = vst [vmem:[#allocation2 + $0x1c8] sm:$0xff] 0.0
          %348 = vst [vmem:[#allocation2 + $0x1d0] sm:$0xff] 0.0
          %349 = vst [vmem:[#allocation2 + $0x1d8] sm:$0xff] 0.0
          %350 = vst [vmem:[#allocation2 + $0x1e0] sm:$0xff] 0.0
          %351 = vst [vmem:[#allocation2 + $0x1e8] sm:$0xff] 0.0
          %352 = vst [vmem:[#allocation2 + $0x1f0] sm:$0xff] 0.0
          %353 = vst [vmem:[#allocation2 + $0x1f8] sm:$0xff] 0.0
          %354 = vst [vmem:[#allocation2 + $0x200] sm:$0xff] 0.0
          %355 = vst [vmem:[#allocation2 + $0x208] sm:$0xff] 0.0
          %356 = vst [vmem:[#allocation2 + $0x210] sm:$0xff] 0.0
          %357 = vst [vmem:[#allocation2 + $0x218] sm:$0xff] 0.0
          %358 = vst [vmem:[#allocation2 + $0x220] sm:$0xff] 0.0
          %359 = vst [vmem:[#allocation2 + $0x228] sm:$0xff] 0.0
          %360 = vst [vmem:[#allocation2 + $0x230] sm:$0xff] 0.0
          %361 = vst [vmem:[#allocation2 + $0x238] sm:$0xff] 0.0
          %362 = vst [vmem:[#allocation2 + $0x240] sm:$0xff] 0.0
          %363 = vst [vmem:[#allocation2 + $0x248] sm:$0xff] 0.0
          %364 = vst [vmem:[#allocation2 + $0x250] sm:$0xff] 0.0
          %365 = vst [vmem:[#allocation2 + $0x258] sm:$0xff] 0.0
          %366 = vst [vmem:[#allocation2 + $0x260] sm:$0xff] 0.0
          %367 = vst [vmem:[#allocation2 + $0x268] sm:$0xff] 0.0
          %368 = vst [vmem:[#allocation2 + $0x270] sm:$0xff] 0.0
          %369 = vst [vmem:[#allocation2 + $0x278] sm:$0xff] 0.0
          %370 = vst [vmem:[#allocation2 + $0x280] sm:$0xff] 0.0
          %371 = vst [vmem:[#allocation2 + $0x288] sm:$0xff] 0.0
          %372 = vst [vmem:[#allocation2 + $0x290] sm:$0xff] 0.0
          %373 = vst [vmem:[#allocation2 + $0x298] sm:$0xff] 0.0
          %374 = vst [vmem:[#allocation2 + $0x2a0] sm:$0xff] 0.0
          %375 = vst [vmem:[#allocation2 + $0x2a8] sm:$0xff] 0.0
          %376 = vst [vmem:[#allocation2 + $0x2b0] sm:$0xff] 0.0
          %377 = vst [vmem:[#allocation2 + $0x2b8] sm:$0xff] 0.0
          %378 = vst [vmem:[#allocation2 + $0x2c0] sm:$0xff] 0.0
          %379 = vst [vmem:[#allocation2 + $0x2c8] sm:$0xff] 0.0
          %380 = vst [vmem:[#allocation2 + $0x2d0] sm:$0xff] 0.0
          %381 = vst [vmem:[#allocation2 + $0x2d8] sm:$0xff] 0.0
          %382 = vst [vmem:[#allocation2 + $0x2e0] sm:$0xff] 0.0
          %383 = vst [vmem:[#allocation2 + $0x2e8] sm:$0xff] 0.0
          %384 = vst [vmem:[#allocation2 + $0x2f0] sm:$0xff] 0.0
          %385 = vst [vmem:[#allocation2 + $0x2f8] sm:$0xff] 0.0
        $region44: #{tpu_custom_call.1} parent=31 // pred_fallthru
          _
        %v386 = vld [vmem:[#allocation2] sm:$0xff]
        %v387 = vld [vmem:[#allocation2 + $0x8] sm:$0xff]
        %v388 = vld [vmem:[#allocation2 + $0x10] sm:$0xff]
        %v389 = vld [vmem:[#allocation2 + $0x18] sm:$0xff]
        %v390 = vld [vmem:[#allocation2 + $0x20] sm:$0xff]
        %v391 = vld [vmem:[#allocation2 + $0x28] sm:$0xff]
        %v392 = vld [vmem:[#allocation2 + $0x30] sm:$0xff]
        %v393 = vld [vmem:[#allocation2 + $0x38] sm:$0xff]
        %v394 = vld [vmem:[#allocation2 + $0x40] sm:$0xff]
        %v395 = vld [vmem:[#allocation2 + $0x48] sm:$0xff]
        %v396 = vld [vmem:[#allocation2 + $0x50] sm:$0xff]
        %v397 = vld [vmem:[#allocation2 + $0x58] sm:$0xff]
        %v398 = vld [vmem:[#allocation2 + $0x60] sm:$0xff]
        %v399 = vld [vmem:[#allocation2 + $0x68] sm:$0xff]
        %v400 = vld [vmem:[#allocation2 + $0x70] sm:$0xff]
        %v401 = vld [vmem:[#allocation2 + $0x78] sm:$0xff]
        %v402 = vld [vmem:[#allocation2 + $0x80] sm:$0xff]
        %v403 = vld [vmem:[#allocation2 + $0x88] sm:$0xff]
        %v404 = vld [vmem:[#allocation2 + $0x90] sm:$0xff]
        %v405 = vld [vmem:[#allocation2 + $0x98] sm:$0xff]
        %v406 = vld [vmem:[#allocation2 + $0xa0] sm:$0xff]
        %v407 = vld [vmem:[#allocation2 + $0xa8] sm:$0xff]
        %v408 = vld [vmem:[#allocation2 + $0xb0] sm:$0xff]
        %v409 = vld [vmem:[#allocation2 + $0xb8] sm:$0xff]
        %v410 = vld [vmem:[#allocation2 + $0xc0] sm:$0xff]
        %v411 = vld [vmem:[#allocation2 + $0xc8] sm:$0xff]
        %v412 = vld [vmem:[#allocation2 + $0xd0] sm:$0xff]
        %v413 = vld [vmem:[#allocation2 + $0xd8] sm:$0xff]
        %v414 = vld [vmem:[#allocation2 + $0xe0] sm:$0xff]
        %v415 = vld [vmem:[#allocation2 + $0xe8] sm:$0xff]
        %v416 = vld [vmem:[#allocation2 + $0xf0] sm:$0xff]
        %v417 = vld [vmem:[#allocation2 + $0xf8] sm:$0xff]
        %v418 = vld [vmem:[#allocation2 + $0x100] sm:$0xff]
        %v419 = vld [vmem:[#allocation2 + $0x108] sm:$0xff]
        %v420 = vld [vmem:[#allocation2 + $0x110] sm:$0xff]
        %v421 = vld [vmem:[#allocation2 + $0x118] sm:$0xff]
        %v422 = vld [vmem:[#allocation2 + $0x120] sm:$0xff]
        %v423 = vld [vmem:[#allocation2 + $0x128] sm:$0xff]
        %v424 = vld [vmem:[#allocation2 + $0x130] sm:$0xff]
        %v425 = vld [vmem:[#allocation2 + $0x138] sm:$0xff]
        %v426 = vld [vmem:[#allocation2 + $0x140] sm:$0xff]
        %v427 = vld [vmem:[#allocation2 + $0x148] sm:$0xff]
        %v428 = vld [vmem:[#allocation2 + $0x150] sm:$0xff]
        %v429 = vld [vmem:[#allocation2 + $0x158] sm:$0xff]
        %v430 = vld [vmem:[#allocation2 + $0x160] sm:$0xff]
        %v431 = vld [vmem:[#allocation2 + $0x168] sm:$0xff]
        %v432 = vld [vmem:[#allocation2 + $0x170] sm:$0xff]
        %v433 = vld [vmem:[#allocation2 + $0x178] sm:$0xff]
        %v434 = vld [vmem:[#allocation2 + $0x180] sm:$0xff]
        %v435 = vld [vmem:[#allocation2 + $0x188] sm:$0xff]
        %v436 = vld [vmem:[#allocation2 + $0x190] sm:$0xff]
        %v437 = vld [vmem:[#allocation2 + $0x198] sm:$0xff]
        %v438 = vld [vmem:[#allocation2 + $0x1a0] sm:$0xff]
        %v439 = vld [vmem:[#allocation2 + $0x1a8] sm:$0xff]
        %v440 = vld [vmem:[#allocation2 + $0x1b0] sm:$0xff]
        %v441 = vld [vmem:[#allocation2 + $0x1b8] sm:$0xff]
        %v442 = vld [vmem:[#allocation2 + $0x1c0] sm:$0xff]
        %v443 = vld [vmem:[#allocation2 + $0x1c8] sm:$0xff]
        %v444 = vld [vmem:[#allocation2 + $0x1d0] sm:$0xff]
        %v445 = vld [vmem:[#allocation2 + $0x1d8] sm:$0xff]
        %v446 = vld [vmem:[#allocation2 + $0x1e0] sm:$0xff]
        %v447 = vld [vmem:[#allocation2 + $0x1e8] sm:$0xff]
        %v448 = vld [vmem:[#allocation2 + $0x1f0] sm:$0xff]
        %v449 = vld [vmem:[#allocation2 + $0x1f8] sm:$0xff]
        %v450 = vld [vmem:[#allocation2 + $0x200] sm:$0xff]
        %v451 = vld [vmem:[#allocation2 + $0x208] sm:$0xff]
        %v452 = vld [vmem:[#allocation2 + $0x210] sm:$0xff]
        %v453 = vld [vmem:[#allocation2 + $0x218] sm:$0xff]
        %v454 = vld [vmem:[#allocation2 + $0x220] sm:$0xff]
        %v455 = vld [vmem:[#allocation2 + $0x228] sm:$0xff]
        %v456 = vld [vmem:[#allocation2 + $0x230] sm:$0xff]
        %v457 = vld [vmem:[#allocation2 + $0x238] sm:$0xff]
        %v458 = vld [vmem:[#allocation2 + $0x240] sm:$0xff]
        %v459 = vld [vmem:[#allocation2 + $0x248] sm:$0xff]
        %v460 = vld [vmem:[#allocation2 + $0x250] sm:$0xff]
        %v461 = vld [vmem:[#allocation2 + $0x258] sm:$0xff]
        %v462 = vld [vmem:[#allocation2 + $0x260] sm:$0xff]
        %v463 = vld [vmem:[#allocation2 + $0x268] sm:$0xff]
        %v464 = vld [vmem:[#allocation2 + $0x270] sm:$0xff]
        %v465 = vld [vmem:[#allocation2 + $0x278] sm:$0xff]
        %v466 = vld [vmem:[#allocation2 + $0x280] sm:$0xff]
        %v467 = vld [vmem:[#allocation2 + $0x288] sm:$0xff]
        %v468 = vld [vmem:[#allocation2 + $0x290] sm:$0xff]
        %v469 = vld [vmem:[#allocation2 + $0x298] sm:$0xff]
        %v470 = vld [vmem:[#allocation2 + $0x2a0] sm:$0xff]
        %v471 = vld [vmem:[#allocation2 + $0x2a8] sm:$0xff]
        %v472 = vld [vmem:[#allocation2 + $0x2b0] sm:$0xff]
        %v473 = vld [vmem:[#allocation2 + $0x2b8] sm:$0xff]
        %v474 = vld [vmem:[#allocation2 + $0x2c0] sm:$0xff]
        %v475 = vld [vmem:[#allocation2 + $0x2c8] sm:$0xff]
        %v476 = vld [vmem:[#allocation2 + $0x2d0] sm:$0xff]
        %v477 = vld [vmem:[#allocation2 + $0x2d8] sm:$0xff]
        %v478 = vld [vmem:[#allocation2 + $0x2e0] sm:$0xff]
        %v479 = vld [vmem:[#allocation2 + $0x2e8] sm:$0xff]
        %v480 = vld [vmem:[#allocation2 + $0x2f0] sm:$0xff]
        %v481 = vld [vmem:[#allocation2 + $0x2f8] sm:$0xff]
        %v482 = vld [vmem:[%s233] sm:$0xff]
        %v483 = vld [vmem:[%s233 + $0x8] sm:$0xff]
        %v484 = vld [vmem:[%s233 + $0x10] sm:$0xff]
        %v485 = vld [vmem:[%s233 + $0x18] sm:$0xff]
        %v486 = vld [vmem:[%s233 + $0x20] sm:$0xff]
        %v487 = vld [vmem:[%s233 + $0x28] sm:$0xff]
        %v488 = vld [vmem:[%s233 + $0x30] sm:$0xff]
        %v489 = vld [vmem:[%s233 + $0x38] sm:$0xff]
        %v490 = vld [vmem:[%s233 + $0x40] sm:$0xff]
        %v491 = vld [vmem:[%s233 + $0x48] sm:$0xff]
        %v492 = vld [vmem:[%s233 + $0x50] sm:$0xff]
        %v493 = vld [vmem:[%s233 + $0x58] sm:$0xff]
        %v494 = vld [vmem:[%s233 + $0x60] sm:$0xff]
        %v495 = vld [vmem:[%s233 + $0x68] sm:$0xff]
        %v496 = vld [vmem:[%s233 + $0x70] sm:$0xff]
        %v497 = vld [vmem:[%s233 + $0x78] sm:$0xff]
        %v498 = vld [vmem:[%s233 + $0x80] sm:$0xff]
        %v499 = vld [vmem:[%s233 + $0x88] sm:$0xff]
        %v500 = vld [vmem:[%s233 + $0x90] sm:$0xff]
        %v501 = vld [vmem:[%s233 + $0x98] sm:$0xff]
        %v502 = vld [vmem:[%s233 + $0xa0] sm:$0xff]
        %v503 = vld [vmem:[%s233 + $0xa8] sm:$0xff]
        %v504 = vld [vmem:[%s233 + $0xb0] sm:$0xff]
        %v505 = vld [vmem:[%s233 + $0xb8] sm:$0xff]
        %v506 = vld [vmem:[%s233 + $0xc0] sm:$0xff]
        %v507 = vld [vmem:[%s233 + $0xc8] sm:$0xff]
        %v508 = vld [vmem:[%s233 + $0xd0] sm:$0xff]
        %v509 = vld [vmem:[%s233 + $0xd8] sm:$0xff]
        %v510 = vld [vmem:[%s233 + $0xe0] sm:$0xff]
        %v511 = vld [vmem:[%s233 + $0xe8] sm:$0xff]
        %v512 = vld [vmem:[%s233 + $0xf0] sm:$0xff]
        %v513 = vld [vmem:[%s233 + $0xf8] sm:$0xff]
        %v514 = vld [vmem:[%s242] sm:$0xff]
        %v515 = vld [vmem:[%s242 + $0x8] sm:$0xf]
        %v516 = vld [vmem:[%s242 + $0xc] sm:$0xff]
        %v517 = vld [vmem:[%s242 + $0x14] sm:$0xf]
        %v518 = vld [vmem:[%s242 + $0x18] sm:$0xff]
        %v519 = vld [vmem:[%s242 + $0x20] sm:$0xf]
        %v520 = vld [vmem:[%s242 + $0x24] sm:$0xff]
        %v521 = vld [vmem:[%s242 + $0x2c] sm:$0xf]
        %v522 = vld [vmem:[%s242 + $0x30] sm:$0xff]
        %v523 = vld [vmem:[%s242 + $0x38] sm:$0xf]
        %v524 = vld [vmem:[%s242 + $0x3c] sm:$0xff]
        %v525 = vld [vmem:[%s242 + $0x44] sm:$0xf]
        %v526 = vld [vmem:[%s242 + $0x48] sm:$0xff]
        %v527 = vld [vmem:[%s242 + $0x50] sm:$0xf]
        %v528 = vld [vmem:[%s242 + $0x54] sm:$0xff]
        %v529 = vld [vmem:[%s242 + $0x5c] sm:$0xf]
        %v530 = vld [vmem:[%s242 + $0x60] sm:$0xff]
        %v531 = vld [vmem:[%s242 + $0x68] sm:$0xf]
        %v532 = vld [vmem:[%s242 + $0x6c] sm:$0xff]
        %v533 = vld [vmem:[%s242 + $0x74] sm:$0xf]
        %v534 = vld [vmem:[%s242 + $0x78] sm:$0xff]
        %v535 = vld [vmem:[%s242 + $0x80] sm:$0xf]
        %v536 = vld [vmem:[%s242 + $0x84] sm:$0xff]
        %v537 = vld [vmem:[%s242 + $0x8c] sm:$0xf]
        %v538 = vld [vmem:[%s242 + $0x90] sm:$0xff]
        %v539 = vld [vmem:[%s242 + $0x98] sm:$0xf]
        %v540 = vld [vmem:[%s242 + $0x9c] sm:$0xff]
        %v541 = vld [vmem:[%s242 + $0xa4] sm:$0xf]
        %v542 = vld [vmem:[%s242 + $0xa8] sm:$0xff]
        %v543 = vld [vmem:[%s242 + $0xb0] sm:$0xf]
        %v544 = vld [vmem:[%s242 + $0xb4] sm:$0xff]
        %v545 = vld [vmem:[%s242 + $0xbc] sm:$0xf]
        %v546 = vld [vmem:[%s242 + $0xc0] sm:$0xff]
        %v547 = vld [vmem:[%s242 + $0xc8] sm:$0xf]
        %v548 = vld [vmem:[%s242 + $0xcc] sm:$0xff]
        %v549 = vld [vmem:[%s242 + $0xd4] sm:$0xf]
        %v550 = vld [vmem:[%s242 + $0xd8] sm:$0xff]
        %v551 = vld [vmem:[%s242 + $0xe0] sm:$0xf]
        %v552 = vld [vmem:[%s242 + $0xe4] sm:$0xff]
        %v553 = vld [vmem:[%s242 + $0xec] sm:$0xf]
        %v554 = vld [vmem:[%s242 + $0xf0] sm:$0xff]
        %v555 = vld [vmem:[%s242 + $0xf8] sm:$0xf]
        %v556 = vld [vmem:[%s242 + $0xfc] sm:$0xff]
        %v557 = vld [vmem:[%s242 + $0x104] sm:$0xf]
        %v558 = vld [vmem:[%s242 + $0x108] sm:$0xff]
        %v559 = vld [vmem:[%s242 + $0x110] sm:$0xf]
        %v560 = vld [vmem:[%s242 + $0x114] sm:$0xff]
        %v561 = vld [vmem:[%s242 + $0x11c] sm:$0xf]
        %v562 = vld [vmem:[%s242 + $0x120] sm:$0xff]
        %v563 = vld [vmem:[%s242 + $0x128] sm:$0xf]
        %v564 = vld [vmem:[%s242 + $0x12c] sm:$0xff]
        %v565 = vld [vmem:[%s242 + $0x134] sm:$0xf]
        %v566 = vld [vmem:[%s242 + $0x138] sm:$0xff]
        %v567 = vld [vmem:[%s242 + $0x140] sm:$0xf]
        %v568 = vld [vmem:[%s242 + $0x144] sm:$0xff]
        %v569 = vld [vmem:[%s242 + $0x14c] sm:$0xf]
        %v570 = vld [vmem:[%s242 + $0x150] sm:$0xff]
        %v571 = vld [vmem:[%s242 + $0x158] sm:$0xf]
        %v572 = vld [vmem:[%s242 + $0x15c] sm:$0xff]
        %v573 = vld [vmem:[%s242 + $0x164] sm:$0xf]
        %v574 = vld [vmem:[%s242 + $0x168] sm:$0xff]
        %v575 = vld [vmem:[%s242 + $0x170] sm:$0xf]
        %v576 = vld [vmem:[%s242 + $0x174] sm:$0xff]
        %v577 = vld [vmem:[%s242 + $0x17c] sm:$0xf]
        %v610 = vunpack.c.l.b16 %v482
        %v611 = vunpack.c.h.b16 %v482
        %v612 = vunpack.c.l.b16 %v483
        %v613 = vunpack.c.h.b16 %v483
        %v614 = vunpack.c.l.b16 %v484
        %v615 = vunpack.c.h.b16 %v484
        %v616 = vunpack.c.l.b16 %v485
        %v617 = vunpack.c.h.b16 %v485
        %v618 = vunpack.c.l.b16 %v486
        %v619 = vunpack.c.h.b16 %v486
        %v620 = vunpack.c.l.b16 %v487
        %v621 = vunpack.c.h.b16 %v487
        %v622 = vunpack.c.l.b16 %v488
        %v623 = vunpack.c.h.b16 %v488
        %v624 = vunpack.c.l.b16 %v489
        %v625 = vunpack.c.h.b16 %v489
        %v626 = vunpack.c.l.b16 %v490
        %v627 = vunpack.c.h.b16 %v490
        %v628 = vunpack.c.l.b16 %v491
        %v629 = vunpack.c.h.b16 %v491
        %v630 = vunpack.c.l.b16 %v492
        %v631 = vunpack.c.h.b16 %v492
        %v632 = vunpack.c.l.b16 %v493
        %v633 = vunpack.c.h.b16 %v493
        %v634 = vunpack.c.l.b16 %v494
        %v635 = vunpack.c.h.b16 %v494
        %v636 = vunpack.c.l.b16 %v495
        %v637 = vunpack.c.h.b16 %v495
        %v638 = vunpack.c.l.b16 %v496
        %v639 = vunpack.c.h.b16 %v496
        %v640 = vunpack.c.l.b16 %v497
        %v641 = vunpack.c.h.b16 %v497
        %v642 = vunpack.c.l.b16 %v498
        %v643 = vunpack.c.h.b16 %v498
        %v644 = vunpack.c.l.b16 %v499
        %v645 = vunpack.c.h.b16 %v499
        %v646 = vunpack.c.l.b16 %v500
        %v647 = vunpack.c.h.b16 %v500
        %v648 = vunpack.c.l.b16 %v501
        %v649 = vunpack.c.h.b16 %v501
        %v650 = vunpack.c.l.b16 %v502
        %v651 = vunpack.c.h.b16 %v502
        %v652 = vunpack.c.l.b16 %v503
        %v653 = vunpack.c.h.b16 %v503
        %v654 = vunpack.c.l.b16 %v504
        %v655 = vunpack.c.h.b16 %v504
        %v656 = vunpack.c.l.b16 %v505
        %v657 = vunpack.c.h.b16 %v505
        %v658 = vunpack.c.l.b16 %v506
        %v659 = vunpack.c.h.b16 %v506
        %v660 = vunpack.c.l.b16 %v507
        %v661 = vunpack.c.h.b16 %v507
        %v662 = vunpack.c.l.b16 %v508
        %v663 = vunpack.c.h.b16 %v508
        %v664 = vunpack.c.l.b16 %v509
        %v665 = vunpack.c.h.b16 %v509
        %v666 = vunpack.c.l.b16 %v510
        %v667 = vunpack.c.h.b16 %v510
        %v668 = vunpack.c.l.b16 %v511
        %v669 = vunpack.c.h.b16 %v511
        %v670 = vunpack.c.l.b16 %v512
        %v671 = vunpack.c.h.b16 %v512
        %v672 = vunpack.c.l.b16 %v513
        %v673 = vunpack.c.h.b16 %v513
        %v674 = vpack.c.b16 %v612, %v610
        %v675 = vpack.c.b16 %v613, %v611
        %v676 = vpack.c.b16 %v616, %v614
        %v677 = vpack.c.b16 %v617, %v615
        %v678 = vpack.c.b16 %v620, %v618
        %v679 = vpack.c.b16 %v621, %v619
        %v680 = vpack.c.b16 %v624, %v622
        %v681 = vpack.c.b16 %v625, %v623
        %v682 = vpack.c.b16 %v628, %v626
        %v683 = vpack.c.b16 %v629, %v627
        %v684 = vpack.c.b16 %v632, %v630
        %v685 = vpack.c.b16 %v633, %v631
        %v686 = vpack.c.b16 %v636, %v634
        %v687 = vpack.c.b16 %v637, %v635
        %v688 = vpack.c.b16 %v640, %v638
        %v689 = vpack.c.b16 %v641, %v639
        %v690 = vpack.c.b16 %v644, %v642
        %v691 = vpack.c.b16 %v645, %v643
        %v692 = vpack.c.b16 %v648, %v646
        %v693 = vpack.c.b16 %v649, %v647
        %v694 = vpack.c.b16 %v652, %v650
        %v695 = vpack.c.b16 %v653, %v651
        %v696 = vpack.c.b16 %v656, %v654
        %v697 = vpack.c.b16 %v657, %v655
        %v698 = vpack.c.b16 %v660, %v658
        %v699 = vpack.c.b16 %v661, %v659
        %v700 = vpack.c.b16 %v664, %v662
        %v701 = vpack.c.b16 %v665, %v663
        %v702 = vpack.c.b16 %v668, %v666
        %v703 = vpack.c.b16 %v669, %v667
        %v704 = vpack.c.b16 %v672, %v670
        %v705 = vpack.c.b16 %v673, %v671
        %v802 = vunpack.c.l.b16 %v514
        %v803 = vunpack.c.h.b16 %v514
        %v804 = vunpack.c.l.b16 %v515
        %v805 = vunpack.c.l.b16 %v516
        %v806 = vunpack.c.h.b16 %v516
        %v807 = vunpack.c.l.b16 %v517
        %v808 = vunpack.c.l.b16 %v518
        %v809 = vunpack.c.h.b16 %v518
        %v810 = vunpack.c.l.b16 %v519
        %v811 = vunpack.c.l.b16 %v520
        %v812 = vunpack.c.h.b16 %v520
        %v813 = vunpack.c.l.b16 %v521
        %v814 = vunpack.c.l.b16 %v522
        %v815 = vunpack.c.h.b16 %v522
        %v816 = vunpack.c.l.b16 %v523
        %v817 = vunpack.c.l.b16 %v524
        %v818 = vunpack.c.h.b16 %v524
        %v819 = vunpack.c.l.b16 %v525
        %v820 = vunpack.c.l.b16 %v526
        %v821 = vunpack.c.h.b16 %v526
        %v822 = vunpack.c.l.b16 %v527
        %v823 = vunpack.c.l.b16 %v528
        %v824 = vunpack.c.h.b16 %v528
        %v825 = vunpack.c.l.b16 %v529
        %v826 = vunpack.c.l.b16 %v530
        %v827 = vunpack.c.h.b16 %v530
        %v828 = vunpack.c.l.b16 %v531
        %v829 = vunpack.c.l.b16 %v532
        %v830 = vunpack.c.h.b16 %v532
        %v831 = vunpack.c.l.b16 %v533
        %v832 = vunpack.c.l.b16 %v534
        %v833 = vunpack.c.h.b16 %v534
        %v834 = vunpack.c.l.b16 %v535
        %v835 = vunpack.c.l.b16 %v536
        %v836 = vunpack.c.h.b16 %v536
        %v837 = vunpack.c.l.b16 %v537
        %v838 = vunpack.c.l.b16 %v538
        %v839 = vunpack.c.h.b16 %v538
        %v840 = vunpack.c.l.b16 %v539
        %v841 = vunpack.c.l.b16 %v540
        %v842 = vunpack.c.h.b16 %v540
        %v843 = vunpack.c.l.b16 %v541
        %v844 = vunpack.c.l.b16 %v542
        %v845 = vunpack.c.h.b16 %v542
        %v846 = vunpack.c.l.b16 %v543
        %v847 = vunpack.c.l.b16 %v544
        %v848 = vunpack.c.h.b16 %v544
        %v849 = vunpack.c.l.b16 %v545
        %v850 = vunpack.c.l.b16 %v546
        %v851 = vunpack.c.h.b16 %v546
        %v852 = vunpack.c.l.b16 %v547
        %v853 = vunpack.c.l.b16 %v548
        %v854 = vunpack.c.h.b16 %v548
        %v855 = vunpack.c.l.b16 %v549
        %v856 = vunpack.c.l.b16 %v550
        %v857 = vunpack.c.h.b16 %v550
        %v858 = vunpack.c.l.b16 %v551
        %v859 = vunpack.c.l.b16 %v552
        %v860 = vunpack.c.h.b16 %v552
        %v861 = vunpack.c.l.b16 %v553
        %v862 = vunpack.c.l.b16 %v554
        %v863 = vunpack.c.h.b16 %v554
        %v864 = vunpack.c.l.b16 %v555
        %v865 = vunpack.c.l.b16 %v556
        %v866 = vunpack.c.h.b16 %v556
        %v867 = vunpack.c.l.b16 %v557
        %v868 = vunpack.c.l.b16 %v558
        %v869 = vunpack.c.h.b16 %v558
        %v870 = vunpack.c.l.b16 %v559
        %v871 = vunpack.c.l.b16 %v560
        %v872 = vunpack.c.h.b16 %v560
        %v873 = vunpack.c.l.b16 %v561
        %v874 = vunpack.c.l.b16 %v562
        %v875 = vunpack.c.h.b16 %v562
        %v876 = vunpack.c.l.b16 %v563
        %v877 = vunpack.c.l.b16 %v564
        %v878 = vunpack.c.h.b16 %v564
        %v879 = vunpack.c.l.b16 %v565
        %v880 = vunpack.c.l.b16 %v566
        %v881 = vunpack.c.h.b16 %v566
        %v882 = vunpack.c.l.b16 %v567
        %v883 = vunpack.c.l.b16 %v568
        %v884 = vunpack.c.h.b16 %v568
        %v885 = vunpack.c.l.b16 %v569
        %v886 = vunpack.c.l.b16 %v570
        %v887 = vunpack.c.h.b16 %v570
        %v888 = vunpack.c.l.b16 %v571
        %v889 = vunpack.c.l.b16 %v572
        %v890 = vunpack.c.h.b16 %v572
        %v891 = vunpack.c.l.b16 %v573
        %v892 = vunpack.c.l.b16 %v574
        %v893 = vunpack.c.h.b16 %v574
        %v894 = vunpack.c.l.b16 %v575
        %v895 = vunpack.c.l.b16 %v576
        %v896 = vunpack.c.h.b16 %v576
        %v897 = vunpack.c.l.b16 %v577
        %v898 = vpack.c.b16 %v805, %v802
        %v899 = vpack.c.b16 %v806, %v803
        %v900 = vpack.c.b16 %v807, %v804
        %v901 = vpack.c.b16 %v811, %v808
        %v902 = vpack.c.b16 %v812, %v809
        %v903 = vpack.c.b16 %v813, %v810
        %v904 = vpack.c.b16 %v817, %v814
        %v905 = vpack.c.b16 %v818, %v815
        %v906 = vpack.c.b16 %v819, %v816
        %v907 = vpack.c.b16 %v823, %v820
        %v908 = vpack.c.b16 %v824, %v821
        %v909 = vpack.c.b16 %v825, %v822
        %v910 = vpack.c.b16 %v829, %v826
        %v911 = vpack.c.b16 %v830, %v827
        %v912 = vpack.c.b16 %v831, %v828
        %v913 = vpack.c.b16 %v835, %v832
        %v914 = vpack.c.b16 %v836, %v833
        %v915 = vpack.c.b16 %v837, %v834
        %v916 = vpack.c.b16 %v841, %v838
        %v917 = vpack.c.b16 %v842, %v839
        %v918 = vpack.c.b16 %v843, %v840
        %v919 = vpack.c.b16 %v847, %v844
        %v920 = vpack.c.b16 %v848, %v845
        %v921 = vpack.c.b16 %v849, %v846
        %v922 = vpack.c.b16 %v853, %v850
        %v923 = vpack.c.b16 %v854, %v851
        %v924 = vpack.c.b16 %v855, %v852
        %v925 = vpack.c.b16 %v859, %v856
        %v926 = vpack.c.b16 %v860, %v857
        %v927 = vpack.c.b16 %v861, %v858
        %v928 = vpack.c.b16 %v865, %v862
        %v929 = vpack.c.b16 %v866, %v863
        %v930 = vpack.c.b16 %v867, %v864
        %v931 = vpack.c.b16 %v871, %v868
        %v932 = vpack.c.b16 %v872, %v869
        %v933 = vpack.c.b16 %v873, %v870
        %v934 = vpack.c.b16 %v877, %v874
        %v935 = vpack.c.b16 %v878, %v875
        %v936 = vpack.c.b16 %v879, %v876
        %v937 = vpack.c.b16 %v883, %v880
        %v938 = vpack.c.b16 %v884, %v881
        %v939 = vpack.c.b16 %v885, %v882
        %v940 = vpack.c.b16 %v889, %v886
        %v941 = vpack.c.b16 %v890, %v887
        %v942 = vpack.c.b16 %v891, %v888
        %v943 = vpack.c.b16 %v895, %v892
        %v944 = vpack.c.b16 %v896, %v893
        %v945 = vpack.c.b16 %v897, %v894
        %994 = vmatprep.subr.bf16.mxu0 %v899
        %995 = vmatpush1.bf16.msra.mxu0 %v898
        %996 = vmatprep.subr.bf16.mxu0 %v902
        %997 = vmatpush1.bf16.msra.mxu0 %v901
        %998 = vmatprep.subr.bf16.mxu0 %v905
        %999 = vmatpush1.bf16.msra.mxu0 %v904
        %1000 = vmatprep.subr.bf16.mxu0 %v908
        %1001 = vmatpush1.bf16.msra.mxu0 %v907
        %1002 = vmatprep.subr.bf16.mxu0 %v911
        %1003 = vmatpush1.bf16.msra.mxu0 %v910
        %1004 = vmatprep.subr.bf16.mxu0 %v914
        %1005 = vmatpush1.bf16.msra.mxu0 %v913
        %1006 = vmatprep.subr.bf16.mxu0 %v917
        %1007 = vmatpush1.bf16.msra.mxu0 %v916
        %1008 = vmatprep.subr.bf16.mxu0 %v920
        %1009 = vmatpush1.bf16.msra.mxu0 %v919
        %1010 = vmatprep.subr.bf16.mxu0 %v923
        %1011 = vmatpush1.bf16.msra.mxu0 %v922
        %1012 = vmatprep.subr.bf16.mxu0 %v926
        %1013 = vmatpush1.bf16.msra.mxu0 %v925
        %1014 = vmatprep.subr.bf16.mxu0 %v929
        %1015 = vmatpush1.bf16.msra.mxu0 %v928
        %1016 = vmatprep.subr.bf16.mxu0 %v932
        %1017 = vmatpush1.bf16.msra.mxu0 %v931
        %1018 = vmatprep.subr.bf16.mxu0 %v935
        %1019 = vmatpush1.bf16.msra.mxu0 %v934
        %1020 = vmatprep.subr.bf16.mxu0 %v938
        %1021 = vmatpush1.bf16.msra.mxu0 %v937
        %1022 = vmatprep.subr.bf16.mxu0 %v941
        %1023 = vmatpush1.bf16.msra.mxu0 %v940
        %1024 = vmatprep.subr.bf16.mxu0 %v944
        %1025 = vmatpush1.bf16.msra.mxu0 %v943
        %1026 = vmatprep.mubr.bf16.mxu0 %v675
        %1027 = vmatmul.mubr.bf16.gmra.mrb[0].mxu0 %v674
        %v1028 = vpop.f32.mrb[0].mxu0
        %v1029 = vadd.f32 0.0, %v1028
        %v1030 = vpop.f32.mrb[0].mxu0
        %v1031 = vadd.f32 0.0, %v1030
        %v1032 = vpop.f32.mrb[0].mxu0
        %v1033 = vadd.f32 0.0, %v1032
        %v1034 = vpop.f32.mrb[0].mxu0
        %v1035 = vadd.f32 0.0, %v1034
        %1036 = vmatprep.mubr.bf16.mxu0 %v677
        %1037 = vmatmul.mubr.bf16.gmra.mrb[0].mxu0 %v676
        %v1038 = vpop.f32.mrb[0].mxu0
        %v1039 = vadd.f32 0.0, %v1038
        %v1040 = vpop.f32.mrb[0].mxu0
        %v1041 = vadd.f32 0.0, %v1040
        %v1042 = vpop.f32.mrb[0].mxu0
        %v1043 = vadd.f32 0.0, %v1042
        %v1044 = vpop.f32.mrb[0].mxu0
        %v1045 = vadd.f32 0.0, %v1044
        %1046 = vmatprep.mubr.bf16.mxu0 %v679
        %1047 = vmatmul.mubr.bf16.gmra.mrb[0].mxu0 %v678
        %v1048 = vpop.f32.mrb[0].mxu0
        %v1049 = vadd.f32 0.0, %v1048
        %v1050 = vpop.f32.mrb[0].mxu0
        %v1051 = vadd.f32 0.0, %v1050
        %v1052 = vpop.f32.mrb[0].mxu0
        %v1053 = vadd.f32 0.0, %v1052
        %v1054 = vpop.f32.mrb[0].mxu0
        %v1055 = vadd.f32 0.0, %v1054
        %1056 = vmatprep.mubr.bf16.mxu0 %v681
        %1057 = vmatmul.mubr.bf16.gmra.mrb[0].mxu0 %v680
        %v1058 = vpop.f32.mrb[0].mxu0
        %v1059 = vadd.f32 0.0, %v1058
        %v1060 = vpop.f32.mrb[0].mxu0
        %v1061 = vadd.f32 0.0, %v1060
        %v1062 = vpop.f32.mrb[0].mxu0
        %v1063 = vadd.f32 0.0, %v1062
        %v1064 = vpop.f32.mrb[0].mxu0
        %v1065 = vadd.f32 0.0, %v1064
        %1066 = vmatprep.mubr.bf16.mxu0 %v683
        %1067 = vmatmul.mubr.bf16.gmra.mrb[0].mxu0 %v682
        %v1068 = vpop.f32.mrb[0].mxu0
        %v1069 = vadd.f32 0.0, %v1068
        %v1070 = vpop.f32.mrb[0].mxu0
        %v1071 = vadd.f32 0.0, %v1070
        %v1072 = vpop.f32.mrb[0].mxu0
        %v1073 = vadd.f32 0.0, %v1072
        %v1074 = vpop.f32.mrb[0].mxu0
        %v1075 = vadd.f32 0.0, %v1074
        %1076 = vmatprep.mubr.bf16.mxu0 %v685
        %1077 = vmatmul.mubr.bf16.gmra.mrb[0].mxu0 %v684
        %v1078 = vpop.f32.mrb[0].mxu0
        %v1079 = vadd.f32 0.0, %v1078
        %v1080 = vpop.f32.mrb[0].mxu0
        %v1081 = vadd.f32 0.0, %v1080
        %v1082 = vpop.f32.mrb[0].mxu0
        %v1083 = vadd.f32 0.0, %v1082
        %v1084 = vpop.f32.mrb[0].mxu0
        %v1085 = vadd.f32 0.0, %v1084
        %1086 = vmatprep.mubr.bf16.mxu0 %v687
        %1087 = vmatmul.mubr.bf16.gmra.mrb[0].mxu0 %v686
        %v1088 = vpop.f32.mrb[0].mxu0
        %v1089 = vadd.f32 0.0, %v1088
        %v1090 = vpop.f32.mrb[0].mxu0
        %v1091 = vadd.f32 0.0, %v1090
        %v1092 = vpop.f32.mrb[0].mxu0
        %v1093 = vadd.f32 0.0, %v1092
        %v1094 = vpop.f32.mrb[0].mxu0
        %v1095 = vadd.f32 0.0, %v1094
        %1096 = vmatprep.mubr.bf16.mxu0 %v689
        %1097 = vmatmul.mubr.bf16.gmra.mrb[0].mxu0 %v688
        %v1098 = vpop.f32.mrb[0].mxu0
        %v1099 = vadd.f32 0.0, %v1098
        %v1100 = vpop.f32.mrb[0].mxu0
        %v1101 = vadd.f32 0.0, %v1100
        %v1102 = vpop.f32.mrb[0].mxu0
        %v1103 = vadd.f32 0.0, %v1102
        %v1104 = vpop.f32.mrb[0].mxu0
        %v1105 = vadd.f32 0.0, %v1104
        %1106 = vmatprep.mubr.bf16.mxu0 %v691
        %1107 = vmatmul.mubr.bf16.gmra.mrb[0].mxu0 %v690
        %v1108 = vpop.f32.mrb[0].mxu0
        %v1109 = vadd.f32 0.0, %v1108
        %v1110 = vpop.f32.mrb[0].mxu0
        %v1111 = vadd.f32 0.0, %v1110
        %v1112 = vpop.f32.mrb[0].mxu0
        %v1113 = vadd.f32 0.0, %v1112
        %v1114 = vpop.f32.mrb[0].mxu0
        %v1115 = vadd.f32 0.0, %v1114
        %1116 = vmatprep.mubr.bf16.mxu0 %v693
        %1117 = vmatmul.mubr.bf16.gmra.mrb[0].mxu0 %v692
        %v1118 = vpop.f32.mrb[0].mxu0
        %v1119 = vadd.f32 0.0, %v1118
        %v1120 = vpop.f32.mrb[0].mxu0
        %v1121 = vadd.f32 0.0, %v1120
        %v1122 = vpop.f32.mrb[0].mxu0
        %v1123 = vadd.f32 0.0, %v1122
        %v1124 = vpop.f32.mrb[0].mxu0
        %v1125 = vadd.f32 0.0, %v1124
        %1126 = vmatprep.mubr.bf16.mxu0 %v695
        %1127 = vmatmul.mubr.bf16.gmra.mrb[0].mxu0 %v694
        %v1128 = vpop.f32.mrb[0].mxu0
        %v1129 = vadd.f32 0.0, %v1128
        %v1130 = vpop.f32.mrb[0].mxu0
        %v1131 = vadd.f32 0.0, %v1130
        %v1132 = vpop.f32.mrb[0].mxu0
        %v1133 = vadd.f32 0.0, %v1132
        %v1134 = vpop.f32.mrb[0].mxu0
        %v1135 = vadd.f32 0.0, %v1134
        %1136 = vmatprep.mubr.bf16.mxu0 %v697
        %1137 = vmatmul.mubr.bf16.gmra.mrb[0].mxu0 %v696
        %v1138 = vpop.f32.mrb[0].mxu0
        %v1139 = vadd.f32 0.0, %v1138
        %v1140 = vpop.f32.mrb[0].mxu0
        %v1141 = vadd.f32 0.0, %v1140
        %v1142 = vpop.f32.mrb[0].mxu0
        %v1143 = vadd.f32 0.0, %v1142
        %v1144 = vpop.f32.mrb[0].mxu0
        %v1145 = vadd.f32 0.0, %v1144
        %1146 = vmatprep.mubr.bf16.mxu0 %v699
        %1147 = vmatmul.mubr.bf16.gmra.mrb[0].mxu0 %v698
        %v1148 = vpop.f32.mrb[0].mxu0
        %v1149 = vadd.f32 0.0, %v1148
        %v1150 = vpop.f32.mrb[0].mxu0
        %v1151 = vadd.f32 0.0, %v1150
        %v1152 = vpop.f32.mrb[0].mxu0
        %v1153 = vadd.f32 0.0, %v1152
        %v1154 = vpop.f32.mrb[0].mxu0
        %v1155 = vadd.f32 0.0, %v1154
        %1156 = vmatprep.mubr.bf16.mxu0 %v701
        %1157 = vmatmul.mubr.bf16.gmra.mrb[0].mxu0 %v700
        %v1158 = vpop.f32.mrb[0].mxu0
        %v1159 = vadd.f32 0.0, %v1158
        %v1160 = vpop.f32.mrb[0].mxu0
        %v1161 = vadd.f32 0.0, %v1160
        %v1162 = vpop.f32.mrb[0].mxu0
        %v1163 = vadd.f32 0.0, %v1162
        %v1164 = vpop.f32.mrb[0].mxu0
        %v1165 = vadd.f32 0.0, %v1164
        %1166 = vmatprep.mubr.bf16.mxu0 %v703
        %1167 = vmatmul.mubr.bf16.gmra.mrb[0].mxu0 %v702
        %v1168 = vpop.f32.mrb[0].mxu0
        %v1169 = vadd.f32 0.0, %v1168
        %v1170 = vpop.f32.mrb[0].mxu0
        %v1171 = vadd.f32 0.0, %v1170
        %v1172 = vpop.f32.mrb[0].mxu0
        %v1173 = vadd.f32 0.0, %v1172
        %v1174 = vpop.f32.mrb[0].mxu0
        %v1175 = vadd.f32 0.0, %v1174
        %1176 = vmatprep.mubr.bf16.mxu0 %v705
        %1177 = vmatmul.mubr.bf16.gmra.mrb[0].mxu0 %v704
        %v1178 = vpop.f32.mrb[0].mxu0
        %v1179 = vadd.f32 0.0, %v1178
        %v1180 = vpop.f32.mrb[0].mxu0
        %v1181 = vadd.f32 0.0, %v1180
        %v1182 = vpop.f32.mrb[0].mxu0
        %v1183 = vadd.f32 0.0, %v1182
        %v1184 = vpop.f32.mrb[0].mxu0
        %v1185 = vadd.f32 0.0, %v1184
        %1186 = vdwg.mxu0
        %1187 = vmatprep.subr.bf16.mxu0 0
        %1188 = vmatpush1.bf16.msra.mxu0 %v900
        %1189 = vmatprep.subr.bf16.mxu0 0
        %1190 = vmatpush1.bf16.msra.mxu0 %v903
        %1191 = vmatprep.subr.bf16.mxu0 0
        %1192 = vmatpush1.bf16.msra.mxu0 %v906
        %1193 = vmatprep.subr.bf16.mxu0 0
        %1194 = vmatpush1.bf16.msra.mxu0 %v909
        %1195 = vmatprep.subr.bf16.mxu0 0
        %1196 = vmatpush1.bf16.msra.mxu0 %v912
        %1197 = vmatprep.subr.bf16.mxu0 0
        %1198 = vmatpush1.bf16.msra.mxu0 %v915
        %1199 = vmatprep.subr.bf16.mxu0 0
        %1200 = vmatpush1.bf16.msra.mxu0 %v918
        %1201 = vmatprep.subr.bf16.mxu0 0
        %1202 = vmatpush1.bf16.msra.mxu0 %v921
        %1203 = vmatprep.subr.bf16.mxu0 0
        %1204 = vmatpush1.bf16.msra.mxu0 %v924
        %1205 = vmatprep.subr.bf16.mxu0 0
        %1206 = vmatpush1.bf16.msra.mxu0 %v927
        %1207 = vmatprep.subr.bf16.mxu0 0
        %1208 = vmatpush1.bf16.msra.mxu0 %v930
        %1209 = vmatprep.subr.bf16.mxu0 0
        %1210 = vmatpush1.bf16.msra.mxu0 %v933
        %1211 = vmatprep.subr.bf16.mxu0 0
        %1212 = vmatpush1.bf16.msra.mxu0 %v936
        %1213 = vmatprep.subr.bf16.mxu0 0
        %1214 = vmatpush1.bf16.msra.mxu0 %v939
        %1215 = vmatprep.subr.bf16.mxu0 0
        %1216 = vmatpush1.bf16.msra.mxu0 %v942
        %1217 = vmatprep.subr.bf16.mxu0 0
        %1218 = vmatpush1.bf16.msra.mxu0 %v945
        %1219 = vmatprep.mubr.bf16.mxu0 %v675
        %1220 = vmatmul.mubr.bf16.gmra.mrb[0].mxu0 %v674
        %v1221 = vpop.f32.mrb[0].mxu0
        %v1222 = vadd.f32 0.0, %v1221
        %v1223 = vpop.f32.mrb[0].mxu0
        %v1224 = vpop.f32.mrb[0].mxu0
        %v1225 = vadd.f32 0.0, %v1224
        %v1226 = vpop.f32.mrb[0].mxu0
        %1227 = vmatprep.mubr.bf16.mxu0 %v677
        %1228 = vmatmul.mubr.bf16.gmra.mrb[0].mxu0 %v676
        %v1229 = vpop.f32.mrb[0].mxu0
        %v1230 = vadd.f32 0.0, %v1229
        %v1231 = vpop.f32.mrb[0].mxu0
        %v1232 = vpop.f32.mrb[0].mxu0
        %v1233 = vadd.f32 0.0, %v1232
        %v1234 = vpop.f32.mrb[0].mxu0
        %1235 = vmatprep.mubr.bf16.mxu0 %v679
        %1236 = vmatmul.mubr.bf16.gmra.mrb[0].mxu0 %v678
        %v1237 = vpop.f32.mrb[0].mxu0
        %v1238 = vadd.f32 0.0, %v1237
        %v1239 = vpop.f32.mrb[0].mxu0
        %v1240 = vpop.f32.mrb[0].mxu0
        %v1241 = vadd.f32 0.0, %v1240
        %v1242 = vpop.f32.mrb[0].mxu0
        %1243 = vmatprep.mubr.bf16.mxu0 %v681
        %1244 = vmatmul.mubr.bf16.gmra.mrb[0].mxu0 %v680
        %v1245 = vpop.f32.mrb[0].mxu0
        %v1246 = vadd.f32 0.0, %v1245
        %v1247 = vpop.f32.mrb[0].mxu0
        %v1248 = vpop.f32.mrb[0].mxu0
        %v1249 = vadd.f32 0.0, %v1248
        %v1250 = vpop.f32.mrb[0].mxu0
        %1251 = vmatprep.mubr.bf16.mxu0 %v683
        %1252 = vmatmul.mubr.bf16.gmra.mrb[0].mxu0 %v682
        %v1253 = vpop.f32.mrb[0].mxu0
        %v1254 = vadd.f32 0.0, %v1253
        %v1255 = vpop.f32.mrb[0].mxu0
        %v1256 = vpop.f32.mrb[0].mxu0
        %v1257 = vadd.f32 0.0, %v1256
        %v1258 = vpop.f32.mrb[0].mxu0
        %1259 = vmatprep.mubr.bf16.mxu0 %v685
        %1260 = vmatmul.mubr.bf16.gmra.mrb[0].mxu0 %v684
        %v1261 = vpop.f32.mrb[0].mxu0
        %v1262 = vadd.f32 0.0, %v1261
        %v1263 = vpop.f32.mrb[0].mxu0
        %v1264 = vpop.f32.mrb[0].mxu0
        %v1265 = vadd.f32 0.0, %v1264
        %v1266 = vpop.f32.mrb[0].mxu0
        %1267 = vmatprep.mubr.bf16.mxu0 %v687
        %1268 = vmatmul.mubr.bf16.gmra.mrb[0].mxu0 %v686
        %v1269 = vpop.f32.mrb[0].mxu0
        %v1270 = vadd.f32 0.0, %v1269
        %v1271 = vpop.f32.mrb[0].mxu0
        %v1272 = vpop.f32.mrb[0].mxu0
        %v1273 = vadd.f32 0.0, %v1272
        %v1274 = vpop.f32.mrb[0].mxu0
        %1275 = vmatprep.mubr.bf16.mxu0 %v689
        %1276 = vmatmul.mubr.bf16.gmra.mrb[0].mxu0 %v688
        %v1277 = vpop.f32.mrb[0].mxu0
        %v1278 = vadd.f32 0.0, %v1277
        %v1279 = vpop.f32.mrb[0].mxu0
        %v1280 = vpop.f32.mrb[0].mxu0
        %v1281 = vadd.f32 0.0, %v1280
        %v1282 = vpop.f32.mrb[0].mxu0
        %1283 = vmatprep.mubr.bf16.mxu0 %v691
        %1284 = vmatmul.mubr.bf16.gmra.mrb[0].mxu0 %v690
        %v1285 = vpop.f32.mrb[0].mxu0
        %v1286 = vadd.f32 0.0, %v1285
        %v1287 = vpop.f32.mrb[0].mxu0
        %v1288 = vpop.f32.mrb[0].mxu0
        %v1289 = vadd.f32 0.0, %v1288
        %v1290 = vpop.f32.mrb[0].mxu0
        %1291 = vmatprep.mubr.bf16.mxu0 %v693
        %1292 = vmatmul.mubr.bf16.gmra.mrb[0].mxu0 %v692
        %v1293 = vpop.f32.mrb[0].mxu0
        %v1294 = vadd.f32 0.0, %v1293
        %v1295 = vpop.f32.mrb[0].mxu0
        %v1296 = vpop.f32.mrb[0].mxu0
        %v1297 = vadd.f32 0.0, %v1296
        %v1298 = vpop.f32.mrb[0].mxu0
        %1299 = vmatprep.mubr.bf16.mxu0 %v695
        %1300 = vmatmul.mubr.bf16.gmra.mrb[0].mxu0 %v694
        %v1301 = vpop.f32.mrb[0].mxu0
        %v1302 = vadd.f32 0.0, %v1301
        %v1303 = vpop.f32.mrb[0].mxu0
        %v1304 = vpop.f32.mrb[0].mxu0
        %v1305 = vadd.f32 0.0, %v1304
        %v1306 = vpop.f32.mrb[0].mxu0
        %1307 = vmatprep.mubr.bf16.mxu0 %v697
        %1308 = vmatmul.mubr.bf16.gmra.mrb[0].mxu0 %v696
        %v1309 = vpop.f32.mrb[0].mxu0
        %v1310 = vadd.f32 0.0, %v1309
        %v1311 = vpop.f32.mrb[0].mxu0
        %v1312 = vpop.f32.mrb[0].mxu0
        %v1313 = vadd.f32 0.0, %v1312
        %v1314 = vpop.f32.mrb[0].mxu0
        %1315 = vmatprep.mubr.bf16.mxu0 %v699
        %1316 = vmatmul.mubr.bf16.gmra.mrb[0].mxu0 %v698
        %v1317 = vpop.f32.mrb[0].mxu0
        %v1318 = vadd.f32 0.0, %v1317
        %v1319 = vpop.f32.mrb[0].mxu0
        %v1320 = vpop.f32.mrb[0].mxu0
        %v1321 = vadd.f32 0.0, %v1320
        %v1322 = vpop.f32.mrb[0].mxu0
        %1323 = vmatprep.mubr.bf16.mxu0 %v701
        %1324 = vmatmul.mubr.bf16.gmra.mrb[0].mxu0 %v700
        %v1325 = vpop.f32.mrb[0].mxu0
        %v1326 = vadd.f32 0.0, %v1325
        %v1327 = vpop.f32.mrb[0].mxu0
        %v1328 = vpop.f32.mrb[0].mxu0
        %v1329 = vadd.f32 0.0, %v1328
        %v1330 = vpop.f32.mrb[0].mxu0
        %1331 = vmatprep.mubr.bf16.mxu0 %v703
        %1332 = vmatmul.mubr.bf16.gmra.mrb[0].mxu0 %v702
        %v1333 = vpop.f32.mrb[0].mxu0
        %v1334 = vadd.f32 0.0, %v1333
        %v1335 = vpop.f32.mrb[0].mxu0
        %v1336 = vpop.f32.mrb[0].mxu0
        %v1337 = vadd.f32 0.0, %v1336
        %v1338 = vpop.f32.mrb[0].mxu0
        %1339 = vmatprep.mubr.bf16.mxu0 %v705
        %1340 = vmatmul.mubr.bf16.gmra.mrb[0].mxu0 %v704
        %v1341 = vpop.f32.mrb[0].mxu0
        %v1342 = vadd.f32 0.0, %v1341
        %v1343 = vpop.f32.mrb[0].mxu0
        %v1344 = vpop.f32.mrb[0].mxu0
        %v1345 = vadd.f32 0.0, %v1344
        %v1346 = vpop.f32.mrb[0].mxu0
        %1347 = vdwg.mxu0
        %v1348 = vadd.f32 %v386, %v1029
        %v1349 = vadd.f32 %v387, %v1031
        %v1350 = vadd.f32 %v388, %v1222
        %v1351 = vadd.f32 %v389, %v1033
        %v1352 = vadd.f32 %v390, %v1035
        %v1353 = vadd.f32 %v391, %v1225
        %v1354 = vadd.f32 %v392, %v1039
        %v1355 = vadd.f32 %v393, %v1041
        %v1356 = vadd.f32 %v394, %v1230
        %v1357 = vadd.f32 %v395, %v1043
        %v1358 = vadd.f32 %v396, %v1045
        %v1359 = vadd.f32 %v397, %v1233
        %v1360 = vadd.f32 %v398, %v1049
        %v1361 = vadd.f32 %v399, %v1051
        %v1362 = vadd.f32 %v400, %v1238
        %v1363 = vadd.f32 %v401, %v1053
        %v1364 = vadd.f32 %v402, %v1055
        %v1365 = vadd.f32 %v403, %v1241
        %v1366 = vadd.f32 %v404, %v1059
        %v1367 = vadd.f32 %v405, %v1061
        %v1368 = vadd.f32 %v406, %v1246
        %v1369 = vadd.f32 %v407, %v1063
        %v1370 = vadd.f32 %v408, %v1065
        %v1371 = vadd.f32 %v409, %v1249
        %v1372 = vadd.f32 %v410, %v1069
        %v1373 = vadd.f32 %v411, %v1071
        %v1374 = vadd.f32 %v412, %v1254
        %v1375 = vadd.f32 %v413, %v1073
        %v1376 = vadd.f32 %v414, %v1075
        %v1377 = vadd.f32 %v415, %v1257
        %v1378 = vadd.f32 %v416, %v1079
        %v1379 = vadd.f32 %v417, %v1081
        %v1380 = vadd.f32 %v418, %v1262
        %v1381 = vadd.f32 %v419, %v1083
        %v1382 = vadd.f32 %v420, %v1085
        %v1383 = vadd.f32 %v421, %v1265
        %v1384 = vadd.f32 %v422, %v1089
        %v1385 = vadd.f32 %v423, %v1091
        %v1386 = vadd.f32 %v424, %v1270
        %v1387 = vadd.f32 %v425, %v1093
        %v1388 = vadd.f32 %v426, %v1095
        %v1389 = vadd.f32 %v427, %v1273
        %v1390 = vadd.f32 %v428, %v1099
        %v1391 = vadd.f32 %v429, %v1101
        %v1392 = vadd.f32 %v430, %v1278
        %v1393 = vadd.f32 %v431, %v1103
        %v1394 = vadd.f32 %v432, %v1105
        %v1395 = vadd.f32 %v433, %v1281
        %v1396 = vadd.f32 %v434, %v1109
        %v1397 = vadd.f32 %v435, %v1111
        %v1398 = vadd.f32 %v436, %v1286
        %v1399 = vadd.f32 %v437, %v1113
        %v1400 = vadd.f32 %v438, %v1115
        %v1401 = vadd.f32 %v439, %v1289
        %v1402 = vadd.f32 %v440, %v1119
        %v1403 = vadd.f32 %v441, %v1121
        %v1404 = vadd.f32 %v442, %v1294
        %v1405 = vadd.f32 %v443, %v1123
        %v1406 = vadd.f32 %v444, %v1125
        %v1407 = vadd.f32 %v445, %v1297
        %v1408 = vadd.f32 %v446, %v1129
        %v1409 = vadd.f32 %v447, %v1131
        %v1410 = vadd.f32 %v448, %v1302
        %v1411 = vadd.f32 %v449, %v1133
        %v1412 = vadd.f32 %v450, %v1135
        %v1413 = vadd.f32 %v451, %v1305
        %v1414 = vadd.f32 %v452, %v1139
        %v1415 = vadd.f32 %v453, %v1141
        %v1416 = vadd.f32 %v454, %v1310
        %v1417 = vadd.f32 %v455, %v1143
        %v1418 = vadd.f32 %v456, %v1145
        %v1419 = vadd.f32 %v457, %v1313
        %v1420 = vadd.f32 %v458, %v1149
        %v1421 = vadd.f32 %v459, %v1151
        %v1422 = vadd.f32 %v460, %v1318
        %v1423 = vadd.f32 %v461, %v1153
        %v1424 = vadd.f32 %v462, %v1155
        %v1425 = vadd.f32 %v463, %v1321
        %v1426 = vadd.f32 %v464, %v1159
        %v1427 = vadd.f32 %v465, %v1161
        %v1428 = vadd.f32 %v466, %v1326
        %v1429 = vadd.f32 %v467, %v1163
        %v1430 = vadd.f32 %v468, %v1165
        %v1431 = vadd.f32 %v469, %v1329
        %v1432 = vadd.f32 %v470, %v1169
        %v1433 = vadd.f32 %v471, %v1171
        %v1434 = vadd.f32 %v472, %v1334
        %v1435 = vadd.f32 %v473, %v1173
        %v1436 = vadd.f32 %v474, %v1175
        %v1437 = vadd.f32 %v475, %v1337
        %v1438 = vadd.f32 %v476, %v1179
        %v1439 = vadd.f32 %v477, %v1181
        %v1440 = vadd.f32 %v478, %v1342
        %v1441 = vadd.f32 %v479, %v1183
        %v1442 = vadd.f32 %v480, %v1185
        %v1443 = vadd.f32 %v481, %v1345
        %1444 = vst [vmem:[#allocation2] sm:$0xff] %v1348
        %1445 = vst [vmem:[#allocation2 + $0x8] sm:$0xff] %v1349
        %1446 = vst [vmem:[#allocation2 + $0x10] sm:$0xff] %v1350
        %1447 = vst [vmem:[#allocation2 + $0x18] sm:$0xff] %v1351
        %1448 = vst [vmem:[#allocation2 + $0x20] sm:$0xff] %v1352
        %1449 = vst [vmem:[#allocation2 + $0x28] sm:$0xff] %v1353
        %1450 = vst [vmem:[#allocation2 + $0x30] sm:$0xff] %v1354
        %1451 = vst [vmem:[#allocation2 + $0x38] sm:$0xff] %v1355
        %1452 = vst [vmem:[#allocation2 + $0x40] sm:$0xff] %v1356
        %1453 = vst [vmem:[#allocation2 + $0x48] sm:$0xff] %v1357
        %1454 = vst [vmem:[#allocation2 + $0x50] sm:$0xff] %v1358
        %1455 = vst [vmem:[#allocation2 + $0x58] sm:$0xff] %v1359
        %1456 = vst [vmem:[#allocation2 + $0x60] sm:$0xff] %v1360
        %1457 = vst [vmem:[#allocation2 + $0x68] sm:$0xff] %v1361
        %1458 = vst [vmem:[#allocation2 + $0x70] sm:$0xff] %v1362
        %1459 = vst [vmem:[#allocation2 + $0x78] sm:$0xff] %v1363
        %1460 = vst [vmem:[#allocation2 + $0x80] sm:$0xff] %v1364
        %1461 = vst [vmem:[#allocation2 + $0x88] sm:$0xff] %v1365
        %1462 = vst [vmem:[#allocation2 + $0x90] sm:$0xff] %v1366
        %1463 = vst [vmem:[#allocation2 + $0x98] sm:$0xff] %v1367
        %1464 = vst [vmem:[#allocation2 + $0xa0] sm:$0xff] %v1368
        %1465 = vst [vmem:[#allocation2 + $0xa8] sm:$0xff] %v1369
        %1466 = vst [vmem:[#allocation2 + $0xb0] sm:$0xff] %v1370
        %1467 = vst [vmem:[#allocation2 + $0xb8] sm:$0xff] %v1371
        %1468 = vst [vmem:[#allocation2 + $0xc0] sm:$0xff] %v1372
        %1469 = vst [vmem:[#allocation2 + $0xc8] sm:$0xff] %v1373
        %1470 = vst [vmem:[#allocation2 + $0xd0] sm:$0xff] %v1374
        %1471 = vst [vmem:[#allocation2 + $0xd8] sm:$0xff] %v1375
        %1472 = vst [vmem:[#allocation2 + $0xe0] sm:$0xff] %v1376
        %1473 = vst [vmem:[#allocation2 + $0xe8] sm:$0xff] %v1377
        %1474 = vst [vmem:[#allocation2 + $0xf0] sm:$0xff] %v1378
        %1475 = vst [vmem:[#allocation2 + $0xf8] sm:$0xff] %v1379
        %1476 = vst [vmem:[#allocation2 + $0x100] sm:$0xff] %v1380
        %1477 = vst [vmem:[#allocation2 + $0x108] sm:$0xff] %v1381
        %1478 = vst [vmem:[#allocation2 + $0x110] sm:$0xff] %v1382
        %1479 = vst [vmem:[#allocation2 + $0x118] sm:$0xff] %v1383
        %1480 = vst [vmem:[#allocation2 + $0x120] sm:$0xff] %v1384
        %1481 = vst [vmem:[#allocation2 + $0x128] sm:$0xff] %v1385
        %1482 = vst [vmem:[#allocation2 + $0x130] sm:$0xff] %v1386
        %1483 = vst [vmem:[#allocation2 + $0x138] sm:$0xff] %v1387
        %1484 = vst [vmem:[#allocation2 + $0x140] sm:$0xff] %v1388
        %1485 = vst [vmem:[#allocation2 + $0x148] sm:$0xff] %v1389
        %1486 = vst [vmem:[#allocation2 + $0x150] sm:$0xff] %v1390
        %1487 = vst [vmem:[#allocation2 + $0x158] sm:$0xff] %v1391
        %1488 = vst [vmem:[#allocation2 + $0x160] sm:$0xff] %v1392
        %1489 = vst [vmem:[#allocation2 + $0x168] sm:$0xff] %v1393
        %1490 = vst [vmem:[#allocation2 + $0x170] sm:$0xff] %v1394
        %1491 = vst [vmem:[#allocation2 + $0x178] sm:$0xff] %v1395
        %1492 = vst [vmem:[#allocation2 + $0x180] sm:$0xff] %v1396
        %1493 = vst [vmem:[#allocation2 + $0x188] sm:$0xff] %v1397
        %1494 = vst [vmem:[#allocation2 + $0x190] sm:$0xff] %v1398
        %1495 = vst [vmem:[#allocation2 + $0x198] sm:$0xff] %v1399
        %1496 = vst [vmem:[#allocation2 + $0x1a0] sm:$0xff] %v1400
        %1497 = vst [vmem:[#allocation2 + $0x1a8] sm:$0xff] %v1401
        %1498 = vst [vmem:[#allocation2 + $0x1b0] sm:$0xff] %v1402
        %1499 = vst [vmem:[#allocation2 + $0x1b8] sm:$0xff] %v1403
        %1500 = vst [vmem:[#allocation2 + $0x1c0] sm:$0xff] %v1404
        %1501 = vst [vmem:[#allocation2 + $0x1c8] sm:$0xff] %v1405
        %1502 = vst [vmem:[#allocation2 + $0x1d0] sm:$0xff] %v1406
        %1503 = vst [vmem:[#allocation2 + $0x1d8] sm:$0xff] %v1407
        %1504 = vst [vmem:[#allocation2 + $0x1e0] sm:$0xff] %v1408
        %1505 = vst [vmem:[#allocation2 + $0x1e8] sm:$0xff] %v1409
        %1506 = vst [vmem:[#allocation2 + $0x1f0] sm:$0xff] %v1410
        %1507 = vst [vmem:[#allocation2 + $0x1f8] sm:$0xff] %v1411
        %1508 = vst [vmem:[#allocation2 + $0x200] sm:$0xff] %v1412
        %1509 = vst [vmem:[#allocation2 + $0x208] sm:$0xff] %v1413
        %1510 = vst [vmem:[#allocation2 + $0x210] sm:$0xff] %v1414
        %1511 = vst [vmem:[#allocation2 + $0x218] sm:$0xff] %v1415
        %1512 = vst [vmem:[#allocation2 + $0x220] sm:$0xff] %v1416
        %1513 = vst [vmem:[#allocation2 + $0x228] sm:$0xff] %v1417
        %1514 = vst [vmem:[#allocation2 + $0x230] sm:$0xff] %v1418
        %1515 = vst [vmem:[#allocation2 + $0x238] sm:$0xff] %v1419
        %1516 = vst [vmem:[#allocation2 + $0x240] sm:$0xff] %v1420
        %1517 = vst [vmem:[#allocation2 + $0x248] sm:$0xff] %v1421
        %1518 = vst [vmem:[#allocation2 + $0x250] sm:$0xff] %v1422
        %1519 = vst [vmem:[#allocation2 + $0x258] sm:$0xff] %v1423
        %1520 = vst [vmem:[#allocation2 + $0x260] sm:$0xff] %v1424
        %1521 = vst [vmem:[#allocation2 + $0x268] sm:$0xff] %v1425
        %1522 = vst [vmem:[#allocation2 + $0x270] sm:$0xff] %v1426
        %1523 = vst [vmem:[#allocation2 + $0x278] sm:$0xff] %v1427
        %1524 = vst [vmem:[#allocation2 + $0x280] sm:$0xff] %v1428
        %1525 = vst [vmem:[#allocation2 + $0x288] sm:$0xff] %v1429
        %1526 = vst [vmem:[#allocation2 + $0x290] sm:$0xff] %v1430
        %1527 = vst [vmem:[#allocation2 + $0x298] sm:$0xff] %v1431
        %1528 = vst [vmem:[#allocation2 + $0x2a0] sm:$0xff] %v1432
        %1529 = vst [vmem:[#allocation2 + $0x2a8] sm:$0xff] %v1433
        %1530 = vst [vmem:[#allocation2 + $0x2b0] sm:$0xff] %v1434
        %1531 = vst [vmem:[#allocation2 + $0x2b8] sm:$0xff] %v1435
        %1532 = vst [vmem:[#allocation2 + $0x2c0] sm:$0xff] %v1436
        %1533 = vst [vmem:[#allocation2 + $0x2c8] sm:$0xff] %v1437
        %1534 = vst [vmem:[#allocation2 + $0x2d0] sm:$0xff] %v1438
        %1535 = vst [vmem:[#allocation2 + $0x2d8] sm:$0xff] %v1439
        %1536 = vst [vmem:[#allocation2 + $0x2e0] sm:$0xff] %v1440
        %1537 = vst [vmem:[#allocation2 + $0x2e8] sm:$0xff] %v1441
        %1538 = vst [vmem:[#allocation2 + $0x2f0] sm:$0xff] %v1442
        %1539 = vst [vmem:[#allocation2 + $0x2f8] sm:$0xff] %v1443
        // Predicated region
        $region45: #{tpu_custom_call.1} parent=31 // pred_check
          %p1540 = pneg %p286
        $region46: #{tpu_custom_call.1} parent=31 // pred_check_branch
          %1542 = sbr.rel (%p1540) target = $region48
        $region47: #{tpu_custom_call.1} parent=31 // pred_region
          %v1543 = vld [vmem:[#allocation2] sm:$0xff]
          %v1544 = vld [vmem:[#allocation2 + $0x8] sm:$0xff]
          %v1545 = vld [vmem:[#allocation2 + $0x10] sm:$0xff]
          %v1546 = vld [vmem:[#allocation2 + $0x18] sm:$0xff]
          %v1547 = vld [vmem:[#allocation2 + $0x20] sm:$0xff]
          %v1548 = vld [vmem:[#allocation2 + $0x28] sm:$0xff]
          %v1549 = vld [vmem:[#allocation2 + $0x30] sm:$0xff]
          %v1550 = vld [vmem:[#allocation2 + $0x38] sm:$0xff]
          %v1551 = vld [vmem:[#allocation2 + $0x40] sm:$0xff]
          %v1552 = vld [vmem:[#allocation2 + $0x48] sm:$0xff]
          %v1553 = vld [vmem:[#allocation2 + $0x50] sm:$0xff]
          %v1554 = vld [vmem:[#allocation2 + $0x58] sm:$0xff]
          %v1555 = vld [vmem:[#allocation2 + $0x60] sm:$0xff]
          %v1556 = vld [vmem:[#allocation2 + $0x68] sm:$0xff]
          %v1557 = vld [vmem:[#allocation2 + $0x70] sm:$0xff]
          %v1558 = vld [vmem:[#allocation2 + $0x78] sm:$0xff]
          %v1559 = vld [vmem:[#allocation2 + $0x80] sm:$0xff]
          %v1560 = vld [vmem:[#allocation2 + $0x88] sm:$0xff]
          %v1561 = vld [vmem:[#allocation2 + $0x90] sm:$0xff]
          %v1562 = vld [vmem:[#allocation2 + $0x98] sm:$0xff]
          %v1563 = vld [vmem:[#allocation2 + $0xa0] sm:$0xff]
          %v1564 = vld [vmem:[#allocation2 + $0xa8] sm:$0xff]
          %v1565 = vld [vmem:[#allocation2 + $0xb0] sm:$0xff]
          %v1566 = vld [vmem:[#allocation2 + $0xb8] sm:$0xff]
          %v1567 = vld [vmem:[#allocation2 + $0xc0] sm:$0xff]
          %v1568 = vld [vmem:[#allocation2 + $0xc8] sm:$0xff]
          %v1569 = vld [vmem:[#allocation2 + $0xd0] sm:$0xff]
          %v1570 = vld [vmem:[#allocation2 + $0xd8] sm:$0xff]
          %v1571 = vld [vmem:[#allocation2 + $0xe0] sm:$0xff]
          %v1572 = vld [vmem:[#allocation2 + $0xe8] sm:$0xff]
          %v1573 = vld [vmem:[#allocation2 + $0xf0] sm:$0xff]
          %v1574 = vld [vmem:[#allocation2 + $0xf8] sm:$0xff]
          %v1575 = vld [vmem:[#allocation2 + $0x100] sm:$0xff]
          %v1576 = vld [vmem:[#allocation2 + $0x108] sm:$0xff]
          %v1577 = vld [vmem:[#allocation2 + $0x110] sm:$0xff]
          %v1578 = vld [vmem:[#allocation2 + $0x118] sm:$0xff]
          %v1579 = vld [vmem:[#allocation2 + $0x120] sm:$0xff]
          %v1580 = vld [vmem:[#allocation2 + $0x128] sm:$0xff]
          %v1581 = vld [vmem:[#allocation2 + $0x130] sm:$0xff]
          %v1582 = vld [vmem:[#allocation2 + $0x138] sm:$0xff]
          %v1583 = vld [vmem:[#allocation2 + $0x140] sm:$0xff]
          %v1584 = vld [vmem:[#allocation2 + $0x148] sm:$0xff]
          %v1585 = vld [vmem:[#allocation2 + $0x150] sm:$0xff]
          %v1586 = vld [vmem:[#allocation2 + $0x158] sm:$0xff]
          %v1587 = vld [vmem:[#allocation2 + $0x160] sm:$0xff]
          %v1588 = vld [vmem:[#allocation2 + $0x168] sm:$0xff]
          %v1589 = vld [vmem:[#allocation2 + $0x170] sm:$0xff]
          %v1590 = vld [vmem:[#allocation2 + $0x178] sm:$0xff]
          %v1591 = vld [vmem:[#allocation2 + $0x180] sm:$0xff]
          %v1592 = vld [vmem:[#allocation2 + $0x188] sm:$0xff]
          %v1593 = vld [vmem:[#allocation2 + $0x190] sm:$0xff]
          %v1594 = vld [vmem:[#allocation2 + $0x198] sm:$0xff]
          %v1595 = vld [vmem:[#allocation2 + $0x1a0] sm:$0xff]
          %v1596 = vld [vmem:[#allocation2 + $0x1a8] sm:$0xff]
          %v1597 = vld [vmem:[#allocation2 + $0x1b0] sm:$0xff]
          %v1598 = vld [vmem:[#allocation2 + $0x1b8] sm:$0xff]
          %v1599 = vld [vmem:[#allocation2 + $0x1c0] sm:$0xff]
          %v1600 = vld [vmem:[#allocation2 + $0x1c8] sm:$0xff]
          %v1601 = vld [vmem:[#allocation2 + $0x1d0] sm:$0xff]
          %v1602 = vld [vmem:[#allocation2 + $0x1d8] sm:$0xff]
          %v1603 = vld [vmem:[#allocation2 + $0x1e0] sm:$0xff]
          %v1604 = vld [vmem:[#allocation2 + $0x1e8] sm:$0xff]
          %v1605 = vld [vmem:[#allocation2 + $0x1f0] sm:$0xff]
          %v1606 = vld [vmem:[#allocation2 + $0x1f8] sm:$0xff]
          %v1607 = vld [vmem:[#allocation2 + $0x200] sm:$0xff]
          %v1608 = vld [vmem:[#allocation2 + $0x208] sm:$0xff]
          %v1609 = vld [vmem:[#allocation2 + $0x210] sm:$0xff]
          %v1610 = vld [vmem:[#allocation2 + $0x218] sm:$0xff]
          %v1611 = vld [vmem:[#allocation2 + $0x220] sm:$0xff]
          %v1612 = vld [vmem:[#allocation2 + $0x228] sm:$0xff]
          %v1613 = vld [vmem:[#allocation2 + $0x230] sm:$0xff]
          %v1614 = vld [vmem:[#allocation2 + $0x238] sm:$0xff]
          %v1615 = vld [vmem:[#allocation2 + $0x240] sm:$0xff]
          %v1616 = vld [vmem:[#allocation2 + $0x248] sm:$0xff]
          %v1617 = vld [vmem:[#allocation2 + $0x250] sm:$0xff]
          %v1618 = vld [vmem:[#allocation2 + $0x258] sm:$0xff]
          %v1619 = vld [vmem:[#allocation2 + $0x260] sm:$0xff]
          %v1620 = vld [vmem:[#allocation2 + $0x268] sm:$0xff]
          %v1621 = vld [vmem:[#allocation2 + $0x270] sm:$0xff]
          %v1622 = vld [vmem:[#allocation2 + $0x278] sm:$0xff]
          %v1623 = vld [vmem:[#allocation2 + $0x280] sm:$0xff]
          %v1624 = vld [vmem:[#allocation2 + $0x288] sm:$0xff]
          %v1625 = vld [vmem:[#allocation2 + $0x290] sm:$0xff]
          %v1626 = vld [vmem:[#allocation2 + $0x298] sm:$0xff]
          %v1627 = vld [vmem:[#allocation2 + $0x2a0] sm:$0xff]
          %v1628 = vld [vmem:[#allocation2 + $0x2a8] sm:$0xff]
          %v1629 = vld [vmem:[#allocation2 + $0x2b0] sm:$0xff]
          %v1630 = vld [vmem:[#allocation2 + $0x2b8] sm:$0xff]
          %v1631 = vld [vmem:[#allocation2 + $0x2c0] sm:$0xff]
          %v1632 = vld [vmem:[#allocation2 + $0x2c8] sm:$0xff]
          %v1633 = vld [vmem:[#allocation2 + $0x2d0] sm:$0xff]
          %v1634 = vld [vmem:[#allocation2 + $0x2d8] sm:$0xff]
          %v1635 = vld [vmem:[#allocation2 + $0x2e0] sm:$0xff]
          %v1636 = vld [vmem:[#allocation2 + $0x2e8] sm:$0xff]
          %v1637 = vld [vmem:[#allocation2 + $0x2f0] sm:$0xff]
          %v1638 = vld [vmem:[#allocation2 + $0x2f8] sm:$0xff]
          %v1639 = vld [vmem:[%s281] sm:$0x7]
          %v1641 = vlaneseq
          %v1642 = vshrl.u32 %v1641, 7
          %v1643 = vsub.s32 0, %v1642
          %v1644 = vrot.slane %v1639, %v1643
          %v1645 = vlaneseq
          %v1646 = vshrl.u32 %v1645, 7
          %v1647 = vsub.s32 1, %v1646
          %v1648 = vrot.slane %v1639, %v1647
          %v1649 = vlaneseq
          %v1650 = vshrl.u32 %v1649, 7
          %v1651 = vsub.s32 2, %v1650
          %v1652 = vrot.slane %v1639, %v1651
          %v1656 = vadd.f32 %v1543, %v1644
          %v1657 = vadd.f32 %v1544, %v1648
          %v1658 = vadd.f32 %v1545, %v1652
          %v1659 = vadd.f32 %v1546, %v1644
          %v1660 = vadd.f32 %v1547, %v1648
          %v1661 = vadd.f32 %v1548, %v1652
          %v1662 = vadd.f32 %v1549, %v1644
          %v1663 = vadd.f32 %v1550, %v1648
          %v1664 = vadd.f32 %v1551, %v1652
          %v1665 = vadd.f32 %v1552, %v1644
          %v1666 = vadd.f32 %v1553, %v1648
          %v1667 = vadd.f32 %v1554, %v1652
          %v1668 = vadd.f32 %v1555, %v1644
          %v1669 = vadd.f32 %v1556, %v1648
          %v1670 = vadd.f32 %v1557, %v1652
          %v1671 = vadd.f32 %v1558, %v1644
          %v1672 = vadd.f32 %v1559, %v1648
          %v1673 = vadd.f32 %v1560, %v1652
          %v1674 = vadd.f32 %v1561, %v1644
          %v1675 = vadd.f32 %v1562, %v1648
          %v1676 = vadd.f32 %v1563, %v1652
          %v1677 = vadd.f32 %v1564, %v1644
          %v1678 = vadd.f32 %v1565, %v1648
          %v1679 = vadd.f32 %v1566, %v1652
          %v1680 = vadd.f32 %v1567, %v1644
          %v1681 = vadd.f32 %v1568, %v1648
          %v1682 = vadd.f32 %v1569, %v1652
          %v1683 = vadd.f32 %v1570, %v1644
          %v1684 = vadd.f32 %v1571, %v1648
          %v1685 = vadd.f32 %v1572, %v1652
          %v1686 = vadd.f32 %v1573, %v1644
          %v1687 = vadd.f32 %v1574, %v1648
          %v1688 = vadd.f32 %v1575, %v1652
          %v1689 = vadd.f32 %v1576, %v1644
          %v1690 = vadd.f32 %v1577, %v1648
          %v1691 = vadd.f32 %v1578, %v1652
          %v1692 = vadd.f32 %v1579, %v1644
          %v1693 = vadd.f32 %v1580, %v1648
          %v1694 = vadd.f32 %v1581, %v1652
          %v1695 = vadd.f32 %v1582, %v1644
          %v1696 = vadd.f32 %v1583, %v1648
          %v1697 = vadd.f32 %v1584, %v1652
          %v1698 = vadd.f32 %v1585, %v1644
          %v1699 = vadd.f32 %v1586, %v1648
          %v1700 = vadd.f32 %v1587, %v1652
          %v1701 = vadd.f32 %v1588, %v1644
          %v1702 = vadd.f32 %v1589, %v1648
          %v1703 = vadd.f32 %v1590, %v1652
          %v1704 = vadd.f32 %v1591, %v1644
          %v1705 = vadd.f32 %v1592, %v1648
          %v1706 = vadd.f32 %v1593, %v1652
          %v1707 = vadd.f32 %v1594, %v1644
          %v1708 = vadd.f32 %v1595, %v1648
          %v1709 = vadd.f32 %v1596, %v1652
          %v1710 = vadd.f32 %v1597, %v1644
          %v1711 = vadd.f32 %v1598, %v1648
          %v1712 = vadd.f32 %v1599, %v1652
          %v1713 = vadd.f32 %v1600, %v1644
          %v1714 = vadd.f32 %v1601, %v1648
          %v1715 = vadd.f32 %v1602, %v1652
          %v1716 = vadd.f32 %v1603, %v1644
          %v1717 = vadd.f32 %v1604, %v1648
          %v1718 = vadd.f32 %v1605, %v1652
          %v1719 = vadd.f32 %v1606, %v1644
          %v1720 = vadd.f32 %v1607, %v1648
          %v1721 = vadd.f32 %v1608, %v1652
          %v1722 = vadd.f32 %v1609, %v1644
          %v1723 = vadd.f32 %v1610, %v1648
          %v1724 = vadd.f32 %v1611, %v1652
          %v1725 = vadd.f32 %v1612, %v1644
          %v1726 = vadd.f32 %v1613, %v1648
          %v1727 = vadd.f32 %v1614, %v1652
          %v1728 = vadd.f32 %v1615, %v1644
          %v1729 = vadd.f32 %v1616, %v1648
          %v1730 = vadd.f32 %v1617, %v1652
          %v1731 = vadd.f32 %v1618, %v1644
          %v1732 = vadd.f32 %v1619, %v1648
          %v1733 = vadd.f32 %v1620, %v1652
          %v1734 = vadd.f32 %v1621, %v1644
          %v1735 = vadd.f32 %v1622, %v1648
          %v1736 = vadd.f32 %v1623, %v1652
          %v1737 = vadd.f32 %v1624, %v1644
          %v1738 = vadd.f32 %v1625, %v1648
          %v1739 = vadd.f32 %v1626, %v1652
          %v1740 = vadd.f32 %v1627, %v1644
          %v1741 = vadd.f32 %v1628, %v1648
          %v1742 = vadd.f32 %v1629, %v1652
          %v1743 = vadd.f32 %v1630, %v1644
          %v1744 = vadd.f32 %v1631, %v1648
          %v1745 = vadd.f32 %v1632, %v1652
          %v1746 = vadd.f32 %v1633, %v1644
          %v1747 = vadd.f32 %v1634, %v1648
          %v1748 = vadd.f32 %v1635, %v1652
          %v1749 = vadd.f32 %v1636, %v1644
          %v1750 = vadd.f32 %v1637, %v1648
          %v1751 = vadd.f32 %v1638, %v1652
          %v1752 = vpack.c.bf16 %v1659, %v1656
          %v1753 = vpack.c.bf16 %v1660, %v1657
          %v1754 = vpack.c.bf16 %v1661, %v1658
          %v1755 = vpack.c.bf16 %v1665, %v1662
          %v1756 = vpack.c.bf16 %v1666, %v1663
          %v1757 = vpack.c.bf16 %v1667, %v1664
          %v1758 = vpack.c.bf16 %v1671, %v1668
          %v1759 = vpack.c.bf16 %v1672, %v1669
          %v1760 = vpack.c.bf16 %v1673, %v1670
          %v1761 = vpack.c.bf16 %v1677, %v1674
          %v1762 = vpack.c.bf16 %v1678, %v1675
          %v1763 = vpack.c.bf16 %v1679, %v1676
          %v1764 = vpack.c.bf16 %v1683, %v1680
          %v1765 = vpack.c.bf16 %v1684, %v1681
          %v1766 = vpack.c.bf16 %v1685, %v1682
          %v1767 = vpack.c.bf16 %v1689, %v1686
          %v1768 = vpack.c.bf16 %v1690, %v1687
          %v1769 = vpack.c.bf16 %v1691, %v1688
          %v1770 = vpack.c.bf16 %v1695, %v1692
          %v1771 = vpack.c.bf16 %v1696, %v1693
          %v1772 = vpack.c.bf16 %v1697, %v1694
          %v1773 = vpack.c.bf16 %v1701, %v1698
          %v1774 = vpack.c.bf16 %v1702, %v1699
          %v1775 = vpack.c.bf16 %v1703, %v1700
          %v1776 = vpack.c.bf16 %v1707, %v1704
          %v1777 = vpack.c.bf16 %v1708, %v1705
          %v1778 = vpack.c.bf16 %v1709, %v1706
          %v1779 = vpack.c.bf16 %v1713, %v1710
          %v1780 = vpack.c.bf16 %v1714, %v1711
          %v1781 = vpack.c.bf16 %v1715, %v1712
          %v1782 = vpack.c.bf16 %v1719, %v1716
          %v1783 = vpack.c.bf16 %v1720, %v1717
          %v1784 = vpack.c.bf16 %v1721, %v1718
          %v1785 = vpack.c.bf16 %v1725, %v1722
          %v1786 = vpack.c.bf16 %v1726, %v1723
          %v1787 = vpack.c.bf16 %v1727, %v1724
          %v1788 = vpack.c.bf16 %v1731, %v1728
          %v1789 = vpack.c.bf16 %v1732, %v1729
          %v1790 = vpack.c.bf16 %v1733, %v1730
          %v1791 = vpack.c.bf16 %v1737, %v1734
          %v1792 = vpack.c.bf16 %v1738, %v1735
          %v1793 = vpack.c.bf16 %v1739, %v1736
          %v1794 = vpack.c.bf16 %v1743, %v1740
          %v1795 = vpack.c.bf16 %v1744, %v1741
          %v1796 = vpack.c.bf16 %v1745, %v1742
          %v1797 = vpack.c.bf16 %v1749, %v1746
          %v1798 = vpack.c.bf16 %v1750, %v1747
          %v1799 = vpack.c.bf16 %v1751, %v1748
          %v1848 = vunpack.c.l.b16 %v1752
          %v1849 = vunpack.c.l.b16 %v1753
          %v1850 = vunpack.c.l.b16 %v1754
          %v1851 = vunpack.c.h.b16 %v1752
          %v1852 = vunpack.c.h.b16 %v1753
          %v1853 = vunpack.c.h.b16 %v1754
          %v1854 = vunpack.c.l.b16 %v1755
          %v1855 = vunpack.c.l.b16 %v1756
          %v1856 = vunpack.c.l.b16 %v1757
          %v1857 = vunpack.c.h.b16 %v1755
          %v1858 = vunpack.c.h.b16 %v1756
          %v1859 = vunpack.c.h.b16 %v1757
          %v1860 = vunpack.c.l.b16 %v1758
          %v1861 = vunpack.c.l.b16 %v1759
          %v1862 = vunpack.c.l.b16 %v1760
          %v1863 = vunpack.c.h.b16 %v1758
          %v1864 = vunpack.c.h.b16 %v1759
          %v1865 = vunpack.c.h.b16 %v1760
          %v1866 = vunpack.c.l.b16 %v1761
          %v1867 = vunpack.c.l.b16 %v1762
          %v1868 = vunpack.c.l.b16 %v1763
          %v1869 = vunpack.c.h.b16 %v1761
          %v1870 = vunpack.c.h.b16 %v1762
          %v1871 = vunpack.c.h.b16 %v1763
          %v1872 = vunpack.c.l.b16 %v1764
          %v1873 = vunpack.c.l.b16 %v1765
          %v1874 = vunpack.c.l.b16 %v1766
          %v1875 = vunpack.c.h.b16 %v1764
          %v1876 = vunpack.c.h.b16 %v1765
          %v1877 = vunpack.c.h.b16 %v1766
          %v1878 = vunpack.c.l.b16 %v1767
          %v1879 = vunpack.c.l.b16 %v1768
          %v1880 = vunpack.c.l.b16 %v1769
          %v1881 = vunpack.c.h.b16 %v1767
          %v1882 = vunpack.c.h.b16 %v1768
          %v1883 = vunpack.c.h.b16 %v1769
          %v1884 = vunpack.c.l.b16 %v1770
          %v1885 = vunpack.c.l.b16 %v1771
          %v1886 = vunpack.c.l.b16 %v1772
          %v1887 = vunpack.c.h.b16 %v1770
          %v1888 = vunpack.c.h.b16 %v1771
          %v1889 = vunpack.c.h.b16 %v1772
          %v1890 = vunpack.c.l.b16 %v1773
          %v1891 = vunpack.c.l.b16 %v1774
          %v1892 = vunpack.c.l.b16 %v1775
          %v1893 = vunpack.c.h.b16 %v1773
          %v1894 = vunpack.c.h.b16 %v1774
          %v1895 = vunpack.c.h.b16 %v1775
          %v1896 = vunpack.c.l.b16 %v1776
          %v1897 = vunpack.c.l.b16 %v1777
          %v1898 = vunpack.c.l.b16 %v1778
          %v1899 = vunpack.c.h.b16 %v1776
          %v1900 = vunpack.c.h.b16 %v1777
          %v1901 = vunpack.c.h.b16 %v1778
          %v1902 = vunpack.c.l.b16 %v1779
          %v1903 = vunpack.c.l.b16 %v1780
          %v1904 = vunpack.c.l.b16 %v1781
          %v1905 = vunpack.c.h.b16 %v1779
          %v1906 = vunpack.c.h.b16 %v1780
          %v1907 = vunpack.c.h.b16 %v1781
          %v1908 = vunpack.c.l.b16 %v1782
          %v1909 = vunpack.c.l.b16 %v1783
          %v1910 = vunpack.c.l.b16 %v1784
          %v1911 = vunpack.c.h.b16 %v1782
          %v1912 = vunpack.c.h.b16 %v1783
          %v1913 = vunpack.c.h.b16 %v1784
          %v1914 = vunpack.c.l.b16 %v1785
          %v1915 = vunpack.c.l.b16 %v1786
          %v1916 = vunpack.c.l.b16 %v1787
          %v1917 = vunpack.c.h.b16 %v1785
          %v1918 = vunpack.c.h.b16 %v1786
          %v1919 = vunpack.c.h.b16 %v1787
          %v1920 = vunpack.c.l.b16 %v1788
          %v1921 = vunpack.c.l.b16 %v1789
          %v1922 = vunpack.c.l.b16 %v1790
          %v1923 = vunpack.c.h.b16 %v1788
          %v1924 = vunpack.c.h.b16 %v1789
          %v1925 = vunpack.c.h.b16 %v1790
          %v1926 = vunpack.c.l.b16 %v1791
          %v1927 = vunpack.c.l.b16 %v1792
          %v1928 = vunpack.c.l.b16 %v1793
          %v1929 = vunpack.c.h.b16 %v1791
          %v1930 = vunpack.c.h.b16 %v1792
          %v1931 = vunpack.c.h.b16 %v1793
          %v1932 = vunpack.c.l.b16 %v1794
          %v1933 = vunpack.c.l.b16 %v1795
          %v1934 = vunpack.c.l.b16 %v1796
          %v1935 = vunpack.c.h.b16 %v1794
          %v1936 = vunpack.c.h.b16 %v1795
          %v1937 = vunpack.c.h.b16 %v1796
          %v1938 = vunpack.c.l.b16 %v1797
          %v1939 = vunpack.c.l.b16 %v1798
          %v1940 = vunpack.c.l.b16 %v1799
          %v1941 = vunpack.c.h.b16 %v1797
          %v1942 = vunpack.c.h.b16 %v1798
          %v1943 = vunpack.c.h.b16 %v1799
          %v1944 = vpack.c.b16 %v1849, %v1848
          %v1945 = vpack.c.b16 %v1850, %v1850
          %v1946 = vpack.c.b16 %v1852, %v1851
          %v1947 = vpack.c.b16 %v1853, %v1853
          %v1948 = vpack.c.b16 %v1855, %v1854
          %v1949 = vpack.c.b16 %v1856, %v1856
          %v1950 = vpack.c.b16 %v1858, %v1857
          %v1951 = vpack.c.b16 %v1859, %v1859
          %v1952 = vpack.c.b16 %v1861, %v1860
          %v1953 = vpack.c.b16 %v1862, %v1862
          %v1954 = vpack.c.b16 %v1864, %v1863
          %v1955 = vpack.c.b16 %v1865, %v1865
          %v1956 = vpack.c.b16 %v1867, %v1866
          %v1957 = vpack.c.b16 %v1868, %v1868
          %v1958 = vpack.c.b16 %v1870, %v1869
          %v1959 = vpack.c.b16 %v1871, %v1871
          %v1960 = vpack.c.b16 %v1873, %v1872
          %v1961 = vpack.c.b16 %v1874, %v1874
          %v1962 = vpack.c.b16 %v1876, %v1875
          %v1963 = vpack.c.b16 %v1877, %v1877
          %v1964 = vpack.c.b16 %v1879, %v1878
          %v1965 = vpack.c.b16 %v1880, %v1880
          %v1966 = vpack.c.b16 %v1882, %v1881
          %v1967 = vpack.c.b16 %v1883, %v1883
          %v1968 = vpack.c.b16 %v1885, %v1884
          %v1969 = vpack.c.b16 %v1886, %v1886
          %v1970 = vpack.c.b16 %v1888, %v1887
          %v1971 = vpack.c.b16 %v1889, %v1889
          %v1972 = vpack.c.b16 %v1891, %v1890
          %v1973 = vpack.c.b16 %v1892, %v1892
          %v1974 = vpack.c.b16 %v1894, %v1893
          %v1975 = vpack.c.b16 %v1895, %v1895
          %v1976 = vpack.c.b16 %v1897, %v1896
          %v1977 = vpack.c.b16 %v1898, %v1898
          %v1978 = vpack.c.b16 %v1900, %v1899
          %v1979 = vpack.c.b16 %v1901, %v1901
          %v1980 = vpack.c.b16 %v1903, %v1902
          %v1981 = vpack.c.b16 %v1904, %v1904
          %v1982 = vpack.c.b16 %v1906, %v1905
          %v1983 = vpack.c.b16 %v1907, %v1907
          %v1984 = vpack.c.b16 %v1909, %v1908
          %v1985 = vpack.c.b16 %v1910, %v1910
          %v1986 = vpack.c.b16 %v1912, %v1911
          %v1987 = vpack.c.b16 %v1913, %v1913
          %v1988 = vpack.c.b16 %v1915, %v1914
          %v1989 = vpack.c.b16 %v1916, %v1916
          %v1990 = vpack.c.b16 %v1918, %v1917
          %v1991 = vpack.c.b16 %v1919, %v1919
          %v1992 = vpack.c.b16 %v1921, %v1920
          %v1993 = vpack.c.b16 %v1922, %v1922
          %v1994 = vpack.c.b16 %v1924, %v1923
          %v1995 = vpack.c.b16 %v1925, %v1925
          %v1996 = vpack.c.b16 %v1927, %v1926
          %v1997 = vpack.c.b16 %v1928, %v1928
          %v1998 = vpack.c.b16 %v1930, %v1929
          %v1999 = vpack.c.b16 %v1931, %v1931
          %v2000 = vpack.c.b16 %v1933, %v1932
          %v2001 = vpack.c.b16 %v1934, %v1934
          %v2002 = vpack.c.b16 %v1936, %v1935
          %v2003 = vpack.c.b16 %v1937, %v1937
          %v2004 = vpack.c.b16 %v1939, %v1938
          %v2005 = vpack.c.b16 %v1940, %v1940
          %v2006 = vpack.c.b16 %v1942, %v1941
          %v2007 = vpack.c.b16 %v1943, %v1943
          %2072 = vst [vmem:[%s273] sm:$0xff] %v1944
          %2073 = vst [vmem:[%s273 + $0x8] sm:$0xf] %v1945
          %2074 = vst [vmem:[%s273 + $0xc] sm:$0xff] %v1946
          %2075 = vst [vmem:[%s273 + $0x14] sm:$0xf] %v1947
          %2076 = vst [vmem:[%s273 + $0x18] sm:$0xff] %v1948
          %2077 = vst [vmem:[%s273 + $0x20] sm:$0xf] %v1949
          %2078 = vst [vmem:[%s273 + $0x24] sm:$0xff] %v1950
          %2079 = vst [vmem:[%s273 + $0x2c] sm:$0xf] %v1951
          %2080 = vst [vmem:[%s273 + $0x30] sm:$0xff] %v1952
          %2081 = vst [vmem:[%s273 + $0x38] sm:$0xf] %v1953
          %2082 = vst [vmem:[%s273 + $0x3c] sm:$0xff] %v1954
          %2083 = vst [vmem:[%s273 + $0x44] sm:$0xf] %v1955
          %2084 = vst [vmem:[%s273 + $0x48] sm:$0xff] %v1956
          %2085 = vst [vmem:[%s273 + $0x50] sm:$0xf] %v1957
          %2086 = vst [vmem:[%s273 + $0x54] sm:$0xff] %v1958
          %2087 = vst [vmem:[%s273 + $0x5c] sm:$0xf] %v1959
          %2088 = vst [vmem:[%s273 + $0x60] sm:$0xff] %v1960
          %2089 = vst [vmem:[%s273 + $0x68] sm:$0xf] %v1961
          %2090 = vst [vmem:[%s273 + $0x6c] sm:$0xff] %v1962
          %2091 = vst [vmem:[%s273 + $0x74] sm:$0xf] %v1963
          %2092 = vst [vmem:[%s273 + $0x78] sm:$0xff] %v1964
          %2093 = vst [vmem:[%s273 + $0x80] sm:$0xf] %v1965
          %2094 = vst [vmem:[%s273 + $0x84] sm:$0xff] %v1966
          %2095 = vst [vmem:[%s273 + $0x8c] sm:$0xf] %v1967
          %2096 = vst [vmem:[%s273 + $0x90] sm:$0xff] %v1968
          %2097 = vst [vmem:[%s273 + $0x98] sm:$0xf] %v1969
          %2098 = vst [vmem:[%s273 + $0x9c] sm:$0xff] %v1970
          %2099 = vst [vmem:[%s273 + $0xa4] sm:$0xf] %v1971
          %2100 = vst [vmem:[%s273 + $0xa8] sm:$0xff] %v1972
          %2101 = vst [vmem:[%s273 + $0xb0] sm:$0xf] %v1973
          %2102 = vst [vmem:[%s273 + $0xb4] sm:$0xff] %v1974
          %2103 = vst [vmem:[%s273 + $0xbc] sm:$0xf] %v1975
          %2104 = vst [vmem:[%s273 + $0xc0] sm:$0xff] %v1976
          %2105 = vst [vmem:[%s273 + $0xc8] sm:$0xf] %v1977
          %2106 = vst [vmem:[%s273 + $0xcc] sm:$0xff] %v1978
          %2107 = vst [vmem:[%s273 + $0xd4] sm:$0xf] %v1979
          %2108 = vst [vmem:[%s273 + $0xd8] sm:$0xff] %v1980
          %2109 = vst [vmem:[%s273 + $0xe0] sm:$0xf] %v1981
          %2110 = vst [vmem:[%s273 + $0xe4] sm:$0xff] %v1982
          %2111 = vst [vmem:[%s273 + $0xec] sm:$0xf] %v1983
          %2112 = vst [vmem:[%s273 + $0xf0] sm:$0xff] %v1984
          %2113 = vst [vmem:[%s273 + $0xf8] sm:$0xf] %v1985
          %2114 = vst [vmem:[%s273 + $0xfc] sm:$0xff] %v1986
          %2115 = vst [vmem:[%s273 + $0x104] sm:$0xf] %v1987
          %2116 = vst [vmem:[%s273 + $0x108] sm:$0xff] %v1988
          %2117 = vst [vmem:[%s273 + $0x110] sm:$0xf] %v1989
          %2118 = vst [vmem:[%s273 + $0x114] sm:$0xff] %v1990
          %2119 = vst [vmem:[%s273 + $0x11c] sm:$0xf] %v1991
          %2120 = vst [vmem:[%s273 + $0x120] sm:$0xff] %v1992
          %2121 = vst [vmem:[%s273 + $0x128] sm:$0xf] %v1993
          %2122 = vst [vmem:[%s273 + $0x12c] sm:$0xff] %v1994
          %2123 = vst [vmem:[%s273 + $0x134] sm:$0xf] %v1995
          %2124 = vst [vmem:[%s273 + $0x138] sm:$0xff] %v1996
          %2125 = vst [vmem:[%s273 + $0x140] sm:$0xf] %v1997
          %2126 = vst [vmem:[%s273 + $0x144] sm:$0xff] %v1998
          %2127 = vst [vmem:[%s273 + $0x14c] sm:$0xf] %v1999
          %2128 = vst [vmem:[%s273 + $0x150] sm:$0xff] %v2000
          %2129 = vst [vmem:[%s273 + $0x158] sm:$0xf] %v2001
          %2130 = vst [vmem:[%s273 + $0x15c] sm:$0xff] %v2002
          %2131 = vst [vmem:[%s273 + $0x164] sm:$0xf] %v2003
          %2132 = vst [vmem:[%s273 + $0x168] sm:$0xff] %v2004
          %2133 = vst [vmem:[%s273 + $0x170] sm:$0xf] %v2005
          %2134 = vst [vmem:[%s273 + $0x174] sm:$0xff] %v2006
          %2135 = vst [vmem:[%s273 + $0x17c] sm:$0xf] %v2007
        $region48: #{tpu_custom_call.1} parent=31 // pred_fallthru
          _
        %s2136 = sand.u32 %s134, 1
        %s2137 = scalar_lea.sflag [#allocation5], %s2136
        %s2138 = sand.u32 %s134, 1
        %s2139 = smul.addr %s2138, 384
        %s2140 = scalar_lea.vmem [#allocation8], %s2139
        // Predicated region
        $region49: #{tpu_custom_call.1} parent=31 // pred_check
          %p2141 = pneg %p144
        $region50: #{tpu_custom_call.1} parent=31 // pred_check_branch
          %2143 = sbr.rel (%p2141) target = $region52
        $region51: #{tpu_custom_call.1} parent=31 // pred_region
          %s2144 = smul.u32 32, %s28
          %s2145 = smul.u32 3, %s29
          %s2147 = ssub.s32 6144, 6144
          %2148 = vsyncadd %s2137, %s2147
          %s2149 = smul.addr %s2144, 6
          %s2150 = sadd.s32 %s2145, %s2149
          %s2151 = smul.addr %s2150, 64
          %s2152 = scalar_lea.hbm %s3, %s2151
          %s2153 = sshll.u32 %s2140, 4
          %s2154 = int_to_ptr.vmem [resolvable:$true] %s2153
          %2159 = dma.vmem_to_hbm [thread:$0]  %s2154, 6144, %s2152, %s2137, 192, 384, 12
        $region52: #{tpu_custom_call.1} parent=31 // pred_fallthru
          _
      $region32: #{tpu_custom_call.1} parent=5 // pred_fallthru
        _
      %p2160 = scmp.le.s32.totalorder 2, %s18
      // Predicated region
      $region53: #{tpu_custom_call.1} parent=5 // pred_check
        %p2161 = pneg %p2160
      $region54: #{tpu_custom_call.1} parent=5 // pred_check_branch
        %2163 = sbr.rel (%p2161) target = $region56
      $region55: #{tpu_custom_call.1} parent=5 // pred_region
        %s2164 = ssub.s32 %s18, 2
        // Predicated region
        $region57: #{tpu_custom_call.1} parent=55 // pred_check
          %p2165 = pneg %p150
        $region58: #{tpu_custom_call.1} parent=55 // pred_check_branch
          %2167 = sbr.rel (%p2165) target = $region60
        $region59: #{tpu_custom_call.1} parent=55 // pred_region
          %s2168 = sand.u32 %s135, 1
          %s2169 = scalar_lea.sflag [#allocation5], %s2168
          %s2170 = sand.u32 %s135, 1
          %s2171 = smul.addr %s2170, 384
          %s2172 = scalar_lea.vmem [#allocation8], %s2171
          %2173 = dma.done %s2169, 6144
        $region60: #{tpu_custom_call.1} parent=55 // pred_fallthru
          _
      $region56: #{tpu_custom_call.1} parent=5 // pred_fallthru
        _
    $region6: #{tpu_custom_call.1} parent=1 // loop_footer
      %s22 = sadd.s32 1, %s18
    $region7: #{tpu_custom_call.1} parent=1 // loop_footer_branch
      %17 = sbr.rel target = $region3
    $region8: #{tpu_custom_call.1} parent=1 // loop_exit
      _
    %2174 = vsyncpa [#allocation4], 1
    %s2175 = scalar_lea.sflag [#allocation4], 1
    %2176 = vsyncpa %s2175, 1
    %2177 = vsyncpa [#allocation7], 1
    %s2178 = scalar_lea.sflag [#allocation7], 1
    %2179 = vsyncpa %s2178, 1
    %2180 = vsyncpa [#allocation5], 1
    %s2181 = scalar_lea.sflag [#allocation5], 1
    %2182 = vsyncpa %s2181, 1

</llo_original>
